<compile_context>
chip_gen: v5e
topology: v5e:2x2
jax: 0.10.0
libtpu: 0.0.40
codegen_flags: <defaults>
</compile_context>

<pallas_src>
import jax
import jax.numpy as jnp
from jax import lax
from jax.experimental import pallas as pl
from jax.experimental.pallas import tpu as pltpu

_BN_EPS = 1e-5


def _round_up(x, m):
    return ((x + m - 1) // m) * m


def _erf(z):
    # Abramowitz & Stegun 7.1.26 polynomial approximation (|err| < 1.5e-7),
    # built only from elementwise ops guaranteed to lower on Mosaic (exp -> EUP).
    a1, a2, a3, a4, a5 = 0.254829592, -0.284496736, 1.421413741, -1.453152027, 1.061405429
    p = 0.3275911
    sgn = jnp.where(z >= 0.0, 1.0, -1.0)
    az = jnp.abs(z)
    t = 1.0 / (1.0 + p * az)
    poly = ((((a5 * t + a4) * t + a3) * t + a2) * t + a1) * t
    return sgn * (1.0 - poly * jnp.exp(-az * az))


def _gelu_exact(y):
    # PyTorch nn.GELU() default (erf-exact) form.
    return 0.5 * y * (1.0 + _erf(y * 0.7071067811865476))


def _matmul_bn_gelu_kernel(x_ref, w_ref, s_ref, b_ref, o_ref):
    # Single big-K matmul per block (K = 9*Cin); accumulation stays in the MXU.
    y = jnp.dot(x_ref[...], w_ref[...], preferred_element_type=jnp.float32)
    # Fused folded-BatchNorm + exact GELU; one lane-dense store (store-lean epilogue).
    o_ref[...] = _gelu_exact(y * s_ref[...] + b_ref[...])


def _pick_tm(N, Kp, Cout):
    """Row-tile size for the (N, Kp) @ (Kp, Cout) matmul.

    Counts *physical* bytes (last two dims rounded to (8,128) tiles), includes
    double-buffered LHS/output, weights and the f32 matmul intermediate, and caps
    the tile so the parallel grid has >= 2 steps when there is enough work.
    """
    def phys(r, c):
        return _round_up(max(r, 1), 8) * _round_up(max(c, 1), 128) * 4

    budget = 16 * 1024 * 1024  # conservative working set; fits every chip's VMEM
    fixed = 2 * phys(Kp, Cout) + 4 * phys(1, Cout)  # weights (dbl-buf) + scale/bias
    tm = 512
    while tm > 8 and fixed + 2 * phys(tm, Kp) + 3 * phys(tm, Cout) > budget:
        tm //= 2  # 2x LHS (dbl-buf) + 2x out (dbl-buf) + 1x matmul intermediate
    cap = _round_up(pl.cdiv(N, 2), 8) if N >= 16 else _round_up(N, 8)
    return max(8, min(tm, cap))


def conv_bn_gelu_pallas(x_nhwc, w, scale, bias):
    """x_nhwc: (B,H,W,Cin) f32; w: (Cout,Cin,3,3); scale/bias: (Cout,) folded BN."""
    B, H, W, Cin = x_nhwc.shape
    Cout = w.shape[0]
    Ho = (H - 1) // 2 + 1
    Wo = (W - 1) // 2 + 1
    N, K = B * Ho * Wo, 9 * Cin

    # im2col once in the wrapper: lane-dense LHS (N, 9*Cin). The stride-2 tap
    # gather is handled by XLA so the kernel sees one contiguous dense matmul.
    xp = jnp.pad(x_nhwc, ((0, 0), (1, 1), (1, 1), (0, 0)))
    taps = [xp[:, ky:ky + 2 * Ho:2, kx:kx + 2 * Wo:2, :]
            for ky in range(3) for kx in range(3)]
    lhs = jnp.concatenate(taps, axis=-1).reshape(N, K).astype(jnp.float32)

    # Weight as (K, Cout), tap-major (ky, kx, ci) rows — matches the LHS column order.
    wmat = jnp.transpose(w, (2, 3, 1, 0)).reshape(K, Cout).astype(jnp.float32)

    # Pad K to a sublane multiple (54 -> 56 for stage 1) and N to a tile multiple.
    Kp = _round_up(K, 8)
    tm = _pick_tm(N, Kp, Cout)
    Np = _round_up(N, tm)
    lhs = jnp.pad(lhs, ((0, Np - N), (0, Kp - K)))
    wmat = jnp.pad(wmat, ((0, Kp - K), (0, 0)))
    s2 = scale.reshape(1, Cout).astype(jnp.float32)
    b2 = bias.reshape(1, Cout).astype(jnp.float32)

    out = pl.pallas_call(
        _matmul_bn_gelu_kernel,
        grid=(Np // tm,),
        in_specs=[pl.BlockSpec((tm, Kp), lambda i: (i, 0)),
                  pl.BlockSpec((Kp, Cout), lambda i: (0, 0)),
                  pl.BlockSpec((1, Cout), lambda i: (0, 0)),
                  pl.BlockSpec((1, Cout), lambda i: (0, 0))],
        out_specs=pl.BlockSpec((tm, Cout), lambda i: (i, 0)),
        out_shape=jax.ShapeDtypeStruct((Np, Cout), jnp.float32),
        compiler_params=pltpu.CompilerParams(
            dimension_semantics=("parallel",),
            vmem_limit_bytes=64 * 1024 * 1024),
    )(lhs, wmat, s2, b2)

    return out[:N].reshape(B, Ho, Wo, Cout)


def _fold_bn(bn):
    scale = bn['gamma'] * lax.rsqrt(bn['var'] + _BN_EPS)
    bias = bn['beta'] - bn['mean'] * scale
    return scale, bias


def branch_forward_pallas(x_nchw, params):
    """Matches Branch.forward: returns (x1, x2, x3) in NCHW."""
    x = jnp.transpose(x_nchw, (0, 2, 3, 1))  # NHWC compute layout
    outs = []
    for i in (1, 2, 3):
        scale, bias = _fold_bn(params[f'bn{i}'])
        x = conv_bn_gelu_pallas(x, params[f'w{i}'], scale, bias)
        outs.append(jnp.transpose(x, (0, 3, 1, 2)))  # NCHW, as in PyTorch
    return tuple(outs)


def branch_forward_ref(x_nchw, params):
    """Pure-JAX/XLA reference (inference-mode BN, erf-exact GELU)."""
    x = jnp.transpose(x_nchw, (0, 2, 3, 1))
    outs = []
    for i in (1, 2, 3):
        w = params[f'w{i}']
        scale, bias = _fold_bn(params[f'bn{i}'])
        y = lax.conv_general_dilated(
            x, jnp.transpose(w, (2, 3, 1, 0)),
            window_strides=(2, 2), padding=((1, 1), (1, 1)),
            dimension_numbers=('NHWC', 'HWIO', 'NHWC'),
            precision=lax.Precision.HIGHEST)
        y = y * scale.reshape(1, 1, 1, -1) + bias.reshape(1, 1, 1, -1)
        x = jax.nn.gelu(y, approximate=False)
        outs.append(jnp.transpose(x, (0, 3, 1, 2)))
    return tuple(outs)


def init_params(key):
    chans = [(64, 6), (128, 64), (256, 128)]
    params = {}
    ks = jax.random.split(key, 3 * 5)
    f32 = jnp.float32
    for idx, (cout, cin) in enumerate(chans, start=1):
        k = ks[(idx - 1) * 5:(idx - 1) * 5 + 5]
        std = (9.0 * cin) ** -0.5
        params[f'w{idx}'] = std * jax.random.normal(k[0], (cout, cin, 3, 3), f32)
        params[f'bn{idx}'] = {
            'gamma': 1.0 + 0.1 * jax.random.normal(k[1], (cout,), f32),
            'beta': 0.1 * jax.random.normal(k[2], (cout,), f32),
            'mean': 0.1 * jax.random.normal(k[3], (cout,), f32),
            'var': 0.5 + jax.random.uniform(k[4], (cout,), f32),
        }
    return params


if __name__ == "__main__":
    B, Cin, H, W = 2, 6, 16, 16
    key = jax.random.PRNGKey(0)
    kx, kp = jax.random.split(key)
    x = jax.random.normal(kx, (B, Cin, H, W), jnp.float32)
    params = init_params(kp)

    fwd = jax.jit(branch_forward_pallas)
    outs = jax.block_until_ready(fwd(x, params))
    refs = jax.block_until_ready(branch_forward_ref(x, params))

    expected_shapes = [(B, 64, H // 2, W // 2), (B, 128, H // 4, W // 4), (B, 256, H // 8, W // 8)]
    max_err = 0.0
    for o, r, s in zip(outs, refs, expected_shapes):
        assert o.shape == s, f"shape mismatch: {o.shape} vs {s}"
        max_err = max(max_err, float(jnp.max(jnp.abs(o - r))))
    assert max_err < 2e-3, f"mismatch vs reference: max abs err = {max_err}"
    print("KERNEL_OK")
</pallas_src>

<mosaic_0001>
module attributes {stable_mosaic.version = 11 : i64} {
  func.func @_matmul_bn_gelu_kernel(%arg0: i32, %arg1: memref<64x56xf32, #tpu.memory_space<vmem>>, %arg2: memref<56x64xf32, #tpu.memory_space<vmem>>, %arg3: memref<1x64xf32, #tpu.memory_space<vmem>>, %arg4: memref<1x64xf32, #tpu.memory_space<vmem>>, %arg5: memref<64x64xf32, #tpu.memory_space<vmem>>) attributes {dimension_semantics = [#tpu.dimension_semantics<parallel>], iteration_bounds = array<i64: 2>, scalar_prefetch = 0 : i64, scratch_operands = 0 : i64, tpu.core_type = #tpu.core_type<tc>, window_params = [{transform_indices = @transform_0, window_bounds = array<i64: 64, 56>}, {pipeline_mode = #tpu.pipeline_mode<synchronous>, transform_indices = @transform_1, window_bounds = array<i64: 56, 64>}, {pipeline_mode = #tpu.pipeline_mode<synchronous>, transform_indices = @transform_2, window_bounds = array<i64: 1, 64>}, {pipeline_mode = #tpu.pipeline_mode<synchronous>, transform_indices = @transform_3, window_bounds = array<i64: 1, 64>}, {transform_indices = @transform_4, window_bounds = array<i64: 64, 64>}]} {
    %c0 = arith.constant 0 : index
    %c0_0 = arith.constant 0 : index
    %0 = vector.load %arg1[%c0, %c0_0] : memref<64x56xf32, #tpu.memory_space<vmem>>, vector<64x56xf32>
    %c0_1 = arith.constant 0 : index
    %c0_2 = arith.constant 0 : index
    %1 = vector.load %arg2[%c0_1, %c0_2] : memref<56x64xf32, #tpu.memory_space<vmem>>, vector<56x64xf32>
    %cst = arith.constant dense<0.000000e+00> : vector<64x64xf32>
    %2 = tpu.matmul %0, %1, %cst {dimension_numbers = #tpu.dot_dimension_numbers<[1], [0], [0], [1], [0, 0, 1, 1], [], []>} : vector<64x56xf32>, vector<56x64xf32>, vector<64x64xf32> -> vector<64x64xf32>
    %c0_3 = arith.constant 0 : index
    %c0_4 = arith.constant 0 : index
    %3 = vector.load %arg3[%c0_3, %c0_4] : memref<1x64xf32, #tpu.memory_space<vmem>>, vector<1x64xf32>
    %4 = vector.broadcast %3 : vector<1x64xf32> to vector<64x64xf32>
    %5 = arith.mulf %2, %4 : vector<64x64xf32>
    %c0_5 = arith.constant 0 : index
    %c0_6 = arith.constant 0 : index
    %6 = vector.load %arg4[%c0_5, %c0_6] : memref<1x64xf32, #tpu.memory_space<vmem>>, vector<1x64xf32>
    %7 = vector.broadcast %6 : vector<1x64xf32> to vector<64x64xf32>
    %8 = arith.addf %5, %7 : vector<64x64xf32>
    %cst_7 = arith.constant 5.000000e-01 : f32
    %9 = vector.broadcast %cst_7 : f32 to vector<64x64xf32>
    %10 = arith.mulf %9, %8 : vector<64x64xf32>
    %cst_8 = arith.constant 0.707106769 : f32
    %11 = vector.broadcast %cst_8 : f32 to vector<64x64xf32>
    %12 = arith.mulf %8, %11 : vector<64x64xf32>
    %cst_9 = arith.constant 0.000000e+00 : f32
    %13 = vector.broadcast %cst_9 : f32 to vector<64x64xf32>
    %14 = arith.cmpf oge, %12, %13 : vector<64x64xf32>
    %cst_10 = arith.constant 1.000000e+00 : f32
    %cst_11 = arith.constant -1.000000e+00 : f32
    %15 = vector.broadcast %cst_10 : f32 to vector<64x64xf32>
    %16 = vector.broadcast %cst_11 : f32 to vector<64x64xf32>
    %17 = arith.select %14, %15, %16 : vector<64x64xi1>, vector<64x64xf32>
    %18 = math.absf %12 : vector<64x64xf32>
    %cst_12 = arith.constant 0.327591091 : f32
    %19 = vector.broadcast %cst_12 : f32 to vector<64x64xf32>
    %20 = arith.mulf %19, %18 : vector<64x64xf32>
    %cst_13 = arith.constant 1.000000e+00 : f32
    %21 = vector.broadcast %cst_13 : f32 to vector<64x64xf32>
    %22 = arith.addf %21, %20 : vector<64x64xf32>
    %cst_14 = arith.constant 1.000000e+00 : f32
    %23 = vector.broadcast %cst_14 : f32 to vector<64x64xf32>
    %24 = arith.divf %23, %22 : vector<64x64xf32>
    %cst_15 = arith.constant 1.06140542 : f32
    %25 = vector.broadcast %cst_15 : f32 to vector<64x64xf32>
    %26 = arith.mulf %25, %24 : vector<64x64xf32>
    %cst_16 = arith.constant -1.45315206 : f32
    %27 = vector.broadcast %cst_16 : f32 to vector<64x64xf32>
    %28 = arith.addf %26, %27 : vector<64x64xf32>
    %29 = arith.mulf %28, %24 : vector<64x64xf32>
    %cst_17 = arith.constant 1.42141378 : f32
    %30 = vector.broadcast %cst_17 : f32 to vector<64x64xf32>
    %31 = arith.addf %29, %30 : vector<64x64xf32>
    %32 = arith.mulf %31, %24 : vector<64x64xf32>
    %cst_18 = arith.constant -0.284496725 : f32
    %33 = vector.broadcast %cst_18 : f32 to vector<64x64xf32>
    %34 = arith.addf %32, %33 : vector<64x64xf32>
    %35 = arith.mulf %34, %24 : vector<64x64xf32>
    %cst_19 = arith.constant 0.254829586 : f32
    %36 = vector.broadcast %cst_19 : f32 to vector<64x64xf32>
    %37 = arith.addf %35, %36 : vector<64x64xf32>
    %38 = arith.mulf %37, %24 : vector<64x64xf32>
    %cst_20 = arith.constant 0.000000e+00 : f32
    %39 = vector.broadcast %cst_20 : f32 to vector<64x64xf32>
    %40 = arith.subf %39, %18 : vector<64x64xf32>
    %41 = arith.mulf %40, %18 : vector<64x64xf32>
    %42 = math.exp %41 : vector<64x64xf32>
    %43 = arith.mulf %38, %42 : vector<64x64xf32>
    %cst_21 = arith.constant 1.000000e+00 : f32
    %44 = vector.broadcast %cst_21 : f32 to vector<64x64xf32>
    %45 = arith.subf %44, %43 : vector<64x64xf32>
    %46 = arith.mulf %17, %45 : vector<64x64xf32>
    %cst_22 = arith.constant 1.000000e+00 : f32
    %47 = vector.broadcast %cst_22 : f32 to vector<64x64xf32>
    %48 = arith.addf %47, %46 : vector<64x64xf32>
    %49 = arith.mulf %10, %48 : vector<64x64xf32>
    %c0_23 = arith.constant 0 : index
    %c0_24 = arith.constant 0 : index
    %50 = vector.load %arg5[%c0_23, %c0_24] : memref<64x64xf32, #tpu.memory_space<vmem>>, vector<64x64xf32>
    tpu.vector_store %arg5[%c0_23, %c0_24], %49 {strides = array<i32>} : memref<64x64xf32, #tpu.memory_space<vmem>>, vector<64x64xf32>,
    return
  }
  func.func @transform_0(%arg0: i32) -> (i32, i32) {
    %c0_i32 = arith.constant 0 : i32
    %c0_i32_0 = arith.constant 0 : i32
    return %arg0, %c0_i32 : i32, i32
  }
  func.func @transform_1(%arg0: i32) -> (i32, i32) {
    %c0_i32 = arith.constant 0 : i32
    %c0_i32_0 = arith.constant 0 : i32
    %c0_i32_1 = arith.constant 0 : i32
    return %c0_i32, %c0_i32_0 : i32, i32
  }
  func.func @transform_2(%arg0: i32) -> (i32, i32) {
    %c0_i32 = arith.constant 0 : i32
    %c0_i32_0 = arith.constant 0 : i32
    %c0_i32_1 = arith.constant 0 : i32
    return %c0_i32, %c0_i32_0 : i32, i32
  }
  func.func @transform_3(%arg0: i32) -> (i32, i32) {
    %c0_i32 = arith.constant 0 : i32
    %c0_i32_0 = arith.constant 0 : i32
    %c0_i32_1 = arith.constant 0 : i32
    return %c0_i32, %c0_i32_0 : i32, i32
  }
  func.func @transform_4(%arg0: i32) -> (i32, i32) {
    %c0_i32 = arith.constant 0 : i32
    %c0_i32_0 = arith.constant 0 : i32
    return %arg0, %c0_i32 : i32, i32
  }
}

module attributes {stable_mosaic.version = 11 : i64} {
  func.func @_matmul_bn_gelu_kernel(%arg0: i32, %arg1: memref<16x576xf32, #tpu.memory_space<vmem>>, %arg2: memref<576x128xf32, #tpu.memory_space<vmem>>, %arg3: memref<1x128xf32, #tpu.memory_space<vmem>>, %arg4: memref<1x128xf32, #tpu.memory_space<vmem>>, %arg5: memref<16x128xf32, #tpu.memory_space<vmem>>) attributes {dimension_semantics = [#tpu.dimension_semantics<parallel>], iteration_bounds = array<i64: 2>, scalar_prefetch = 0 : i64, scratch_operands = 0 : i64, tpu.core_type = #tpu.core_type<tc>, window_params = [{transform_indices = @transform_0, window_bounds = array<i64: 16, 576>}, {pipeline_mode = #tpu.pipeline_mode<synchronous>, transform_indices = @transform_1, window_bounds = array<i64: 576, 128>}, {pipeline_mode = #tpu.pipeline_mode<synchronous>, transform_indices = @transform_2, window_bounds = array<i64: 1, 128>}, {pipeline_mode = #tpu.pipeline_mode<synchronous>, transform_indices = @transform_3, window_bounds = array<i64: 1, 128>}, {transform_indices = @transform_4, window_bounds = array<i64: 16, 128>}]} {
    %c0 = arith.constant 0 : index
    %c0_0 = arith.constant 0 : index
    %0 = vector.load %arg1[%c0, %c0_0] : memref<16x576xf32, #tpu.memory_space<vmem>>, vector<16x576xf32>
    %c0_1 = arith.constant 0 : index
    %c0_2 = arith.constant 0 : index
    %1 = vector.load %arg2[%c0_1, %c0_2] : memref<576x128xf32, #tpu.memory_space<vmem>>, vector<576x128xf32>
    %cst = arith.constant dense<0.000000e+00> : vector<16x128xf32>
    %2 = tpu.matmul %0, %1, %cst {dimension_numbers = #tpu.dot_dimension_numbers<[1], [0], [0], [1], [0, 0, 1, 1], [], []>} : vector<16x576xf32>, vector<576x128xf32>, vector<16x128xf32> -> vector<16x128xf32>
    %c0_3 = arith.constant 0 : index
    %c0_4 = arith.constant 0 : index
    %3 = vector.load %arg3[%c0_3, %c0_4] : memref<1x128xf32, #tpu.memory_space<vmem>>, vector<1x128xf32>
    %4 = vector.broadcast %3 : vector<1x128xf32> to vector<16x128xf32>
    %5 = arith.mulf %2, %4 : vector<16x128xf32>
    %c0_5 = arith.constant 0 : index
    %c0_6 = arith.constant 0 : index
    %6 = vector.load %arg4[%c0_5, %c0_6] : memref<1x128xf32, #tpu.memory_space<vmem>>, vector<1x128xf32>
    %7 = vector.broadcast %6 : vector<1x128xf32> to vector<16x128xf32>
    %8 = arith.addf %5, %7 : vector<16x128xf32>
    %cst_7 = arith.constant 5.000000e-01 : f32
    %9 = vector.broadcast %cst_7 : f32 to vector<16x128xf32>
    %10 = arith.mulf %9, %8 : vector<16x128xf32>
    %cst_8 = arith.constant 0.707106769 : f32
    %11 = vector.broadcast %cst_8 : f32 to vector<16x128xf32>
    %12 = arith.mulf %8, %11 : vector<16x128xf32>
    %cst_9 = arith.constant 0.000000e+00 : f32
    %13 = vector.broadcast %cst_9 : f32 to vector<16x128xf32>
    %14 = arith.cmpf oge, %12, %13 : vector<16x128xf32>
    %cst_10 = arith.constant 1.000000e+00 : f32
    %cst_11 = arith.constant -1.000000e+00 : f32
    %15 = vector.broadcast %cst_10 : f32 to vector<16x128xf32>
    %16 = vector.broadcast %cst_11 : f32 to vector<16x128xf32>
    %17 = arith.select %14, %15, %16 : vector<16x128xi1>, vector<16x128xf32>
    %18 = math.absf %12 : vector<16x128xf32>
    %cst_12 = arith.constant 0.327591091 : f32
    %19 = vector.broadcast %cst_12 : f32 to vector<16x128xf32>
    %20 = arith.mulf %19, %18 : vector<16x128xf32>
    %cst_13 = arith.constant 1.000000e+00 : f32
    %21 = vector.broadcast %cst_13 : f32 to vector<16x128xf32>
    %22 = arith.addf %21, %20 : vector<16x128xf32>
    %cst_14 = arith.constant 1.000000e+00 : f32
    %23 = vector.broadcast %cst_14 : f32 to vector<16x128xf32>
    %24 = arith.divf %23, %22 : vector<16x128xf32>
    %cst_15 = arith.constant 1.06140542 : f32
    %25 = vector.broadcast %cst_15 : f32 to vector<16x128xf32>
    %26 = arith.mulf %25, %24 : vector<16x128xf32>
    %cst_16 = arith.constant -1.45315206 : f32
    %27 = vector.broadcast %cst_16 : f32 to vector<16x128xf32>
    %28 = arith.addf %26, %27 : vector<16x128xf32>
    %29 = arith.mulf %28, %24 : vector<16x128xf32>
    %cst_17 = arith.constant 1.42141378 : f32
    %30 = vector.broadcast %cst_17 : f32 to vector<16x128xf32>
    %31 = arith.addf %29, %30 : vector<16x128xf32>
    %32 = arith.mulf %31, %24 : vector<16x128xf32>
    %cst_18 = arith.constant -0.284496725 : f32
    %33 = vector.broadcast %cst_18 : f32 to vector<16x128xf32>
    %34 = arith.addf %32, %33 : vector<16x128xf32>
    %35 = arith.mulf %34, %24 : vector<16x128xf32>
    %cst_19 = arith.constant 0.254829586 : f32
    %36 = vector.broadcast %cst_19 : f32 to vector<16x128xf32>
    %37 = arith.addf %35, %36 : vector<16x128xf32>
    %38 = arith.mulf %37, %24 : vector<16x128xf32>
    %cst_20 = arith.constant 0.000000e+00 : f32
    %39 = vector.broadcast %cst_20 : f32 to vector<16x128xf32>
    %40 = arith.subf %39, %18 : vector<16x128xf32>
    %41 = arith.mulf %40, %18 : vector<16x128xf32>
    %42 = math.exp %41 : vector<16x128xf32>
    %43 = arith.mulf %38, %42 : vector<16x128xf32>
    %cst_21 = arith.constant 1.000000e+00 : f32
    %44 = vector.broadcast %cst_21 : f32 to vector<16x128xf32>
    %45 = arith.subf %44, %43 : vector<16x128xf32>
    %46 = arith.mulf %17, %45 : vector<16x128xf32>
    %cst_22 = arith.constant 1.000000e+00 : f32
    %47 = vector.broadcast %cst_22 : f32 to vector<16x128xf32>
    %48 = arith.addf %47, %46 : vector<16x128xf32>
    %49 = arith.mulf %10, %48 : vector<16x128xf32>
    %c0_23 = arith.constant 0 : index
    %c0_24 = arith.constant 0 : index
    %50 = vector.load %arg5[%c0_23, %c0_24] : memref<16x128xf32, #tpu.memory_space<vmem>>, vector<16x128xf32>
    tpu.vector_store %arg5[%c0_23, %c0_24], %49 {strides = array<i32>} : memref<16x128xf32, #tpu.memory_space<vmem>>, vector<16x128xf32>,
    return
  }
  func.func @transform_0(%arg0: i32) -> (i32, i32) {
    %c0_i32 = arith.constant 0 : i32
    %c0_i32_0 = arith.constant 0 : i32
    return %arg0, %c0_i32 : i32, i32
  }
  func.func @transform_1(%arg0: i32) -> (i32, i32) {
    %c0_i32 = arith.constant 0 : i32
    %c0_i32_0 = arith.constant 0 : i32
    %c0_i32_1 = arith.constant 0 : i32
    return %c0_i32, %c0_i32_0 : i32, i32
  }
  func.func @transform_2(%arg0: i32) -> (i32, i32) {
    %c0_i32 = arith.constant 0 : i32
    %c0_i32_0 = arith.constant 0 : i32
    %c0_i32_1 = arith.constant 0 : i32
    return %c0_i32, %c0_i32_0 : i32, i32
  }
  func.func @transform_3(%arg0: i32) -> (i32, i32) {
    %c0_i32 = arith.constant 0 : i32
    %c0_i32_0 = arith.constant 0 : i32
    %c0_i32_1 = arith.constant 0 : i32
    return %c0_i32, %c0_i32_0 : i32, i32
  }
  func.func @transform_4(%arg0: i32) -> (i32, i32) {
    %c0_i32 = arith.constant 0 : i32
    %c0_i32_0 = arith.constant 0 : i32
    return %arg0, %c0_i32 : i32, i32
  }
}

module attributes {stable_mosaic.version = 11 : i64} {
  func.func @_matmul_bn_gelu_kernel(%arg0: i32, %arg1: memref<8x1152xf32, #tpu.memory_space<vmem>>, %arg2: memref<1152x256xf32, #tpu.memory_space<vmem>>, %arg3: memref<1x256xf32, #tpu.memory_space<vmem>>, %arg4: memref<1x256xf32, #tpu.memory_space<vmem>>, %arg5: memref<8x256xf32, #tpu.memory_space<vmem>>) attributes {dimension_semantics = [#tpu.dimension_semantics<parallel>], iteration_bounds = array<i64: 1>, scalar_prefetch = 0 : i64, scratch_operands = 0 : i64, tpu.core_type = #tpu.core_type<tc>, window_params = [{transform_indices = @transform_0, window_bounds = array<i64: 8, 1152>}, {pipeline_mode = #tpu.pipeline_mode<synchronous>, transform_indices = @transform_1, window_bounds = array<i64: 1152, 256>}, {pipeline_mode = #tpu.pipeline_mode<synchronous>, transform_indices = @transform_2, window_bounds = array<i64: 1, 256>}, {pipeline_mode = #tpu.pipeline_mode<synchronous>, transform_indices = @transform_3, window_bounds = array<i64: 1, 256>}, {transform_indices = @transform_4, window_bounds = array<i64: 8, 256>}]} {
    %c0 = arith.constant 0 : index
    %c0_0 = arith.constant 0 : index
    %0 = vector.load %arg1[%c0, %c0_0] : memref<8x1152xf32, #tpu.memory_space<vmem>>, vector<8x1152xf32>
    %c0_1 = arith.constant 0 : index
    %c0_2 = arith.constant 0 : index
    %1 = vector.load %arg2[%c0_1, %c0_2] : memref<1152x256xf32, #tpu.memory_space<vmem>>, vector<1152x256xf32>
    %cst = arith.constant dense<0.000000e+00> : vector<8x256xf32>
    %2 = tpu.matmul %0, %1, %cst {dimension_numbers = #tpu.dot_dimension_numbers<[1], [0], [0], [1], [0, 0, 1, 1], [], []>} : vector<8x1152xf32>, vector<1152x256xf32>, vector<8x256xf32> -> vector<8x256xf32>
    %c0_3 = arith.constant 0 : index
    %c0_4 = arith.constant 0 : index
    %3 = vector.load %arg3[%c0_3, %c0_4] : memref<1x256xf32, #tpu.memory_space<vmem>>, vector<1x256xf32>
    %4 = vector.broadcast %3 : vector<1x256xf32> to vector<8x256xf32>
    %5 = arith.mulf %2, %4 : vector<8x256xf32>
    %c0_5 = arith.constant 0 : index
    %c0_6 = arith.constant 0 : index
    %6 = vector.load %arg4[%c0_5, %c0_6] : memref<1x256xf32, #tpu.memory_space<vmem>>, vector<1x256xf32>
    %7 = vector.broadcast %6 : vector<1x256xf32> to vector<8x256xf32>
    %8 = arith.addf %5, %7 : vector<8x256xf32>
    %cst_7 = arith.constant 5.000000e-01 : f32
    %9 = vector.broadcast %cst_7 : f32 to vector<8x256xf32>
    %10 = arith.mulf %9, %8 : vector<8x256xf32>
    %cst_8 = arith.constant 0.707106769 : f32
    %11 = vector.broadcast %cst_8 : f32 to vector<8x256xf32>
    %12 = arith.mulf %8, %11 : vector<8x256xf32>
    %cst_9 = arith.constant 0.000000e+00 : f32
    %13 = vector.broadcast %cst_9 : f32 to vector<8x256xf32>
    %14 = arith.cmpf oge, %12, %13 : vector<8x256xf32>
    %cst_10 = arith.constant 1.000000e+00 : f32
    %cst_11 = arith.constant -1.000000e+00 : f32
    %15 = vector.broadcast %cst_10 : f32 to vector<8x256xf32>
    %16 = vector.broadcast %cst_11 : f32 to vector<8x256xf32>
    %17 = arith.select %14, %15, %16 : vector<8x256xi1>, vector<8x256xf32>
    %18 = math.absf %12 : vector<8x256xf32>
    %cst_12 = arith.constant 0.327591091 : f32
    %19 = vector.broadcast %cst_12 : f32 to vector<8x256xf32>
    %20 = arith.mulf %19, %18 : vector<8x256xf32>
    %cst_13 = arith.constant 1.000000e+00 : f32
    %21 = vector.broadcast %cst_13 : f32 to vector<8x256xf32>
    %22 = arith.addf %21, %20 : vector<8x256xf32>
    %cst_14 = arith.constant 1.000000e+00 : f32
    %23 = vector.broadcast %cst_14 : f32 to vector<8x256xf32>
    %24 = arith.divf %23, %22 : vector<8x256xf32>
    %cst_15 = arith.constant 1.06140542 : f32
    %25 = vector.broadcast %cst_15 : f32 to vector<8x256xf32>
    %26 = arith.mulf %25, %24 : vector<8x256xf32>
    %cst_16 = arith.constant -1.45315206 : f32
    %27 = vector.broadcast %cst_16 : f32 to vector<8x256xf32>
    %28 = arith.addf %26, %27 : vector<8x256xf32>
    %29 = arith.mulf %28, %24 : vector<8x256xf32>
    %cst_17 = arith.constant 1.42141378 : f32
    %30 = vector.broadcast %cst_17 : f32 to vector<8x256xf32>
    %31 = arith.addf %29, %30 : vector<8x256xf32>
    %32 = arith.mulf %31, %24 : vector<8x256xf32>
    %cst_18 = arith.constant -0.284496725 : f32
    %33 = vector.broadcast %cst_18 : f32 to vector<8x256xf32>
    %34 = arith.addf %32, %33 : vector<8x256xf32>
    %35 = arith.mulf %34, %24 : vector<8x256xf32>
    %cst_19 = arith.constant 0.254829586 : f32
    %36 = vector.broadcast %cst_19 : f32 to vector<8x256xf32>
    %37 = arith.addf %35, %36 : vector<8x256xf32>
    %38 = arith.mulf %37, %24 : vector<8x256xf32>
    %cst_20 = arith.constant 0.000000e+00 : f32
    %39 = vector.broadcast %cst_20 : f32 to vector<8x256xf32>
    %40 = arith.subf %39, %18 : vector<8x256xf32>
    %41 = arith.mulf %40, %18 : vector<8x256xf32>
    %42 = math.exp %41 : vector<8x256xf32>
    %43 = arith.mulf %38, %42 : vector<8x256xf32>
    %cst_21 = arith.constant 1.000000e+00 : f32
    %44 = vector.broadcast %cst_21 : f32 to vector<8x256xf32>
    %45 = arith.subf %44, %43 : vector<8x256xf32>
    %46 = arith.mulf %17, %45 : vector<8x256xf32>
    %cst_22 = arith.constant 1.000000e+00 : f32
    %47 = vector.broadcast %cst_22 : f32 to vector<8x256xf32>
    %48 = arith.addf %47, %46 : vector<8x256xf32>
    %49 = arith.mulf %10, %48 : vector<8x256xf32>
    %c0_23 = arith.constant 0 : index
    %c0_24 = arith.constant 0 : index
    %50 = vector.load %arg5[%c0_23, %c0_24] : memref<8x256xf32, #tpu.memory_space<vmem>>, vector<8x256xf32>
    tpu.vector_store %arg5[%c0_23, %c0_24], %49 {strides = array<i32>} : memref<8x256xf32, #tpu.memory_space<vmem>>, vector<8x256xf32>,
    return
  }
  func.func @transform_0(%arg0: i32) -> (i32, i32) {
    %c0_i32 = arith.constant 0 : i32
    %c0_i32_0 = arith.constant 0 : i32
    return %arg0, %c0_i32 : i32, i32
  }
  func.func @transform_1(%arg0: i32) -> (i32, i32) {
    %c0_i32 = arith.constant 0 : i32
    %c0_i32_0 = arith.constant 0 : i32
    %c0_i32_1 = arith.constant 0 : i32
    return %c0_i32, %c0_i32_0 : i32, i32
  }
  func.func @transform_2(%arg0: i32) -> (i32, i32) {
    %c0_i32 = arith.constant 0 : i32
    %c0_i32_0 = arith.constant 0 : i32
    %c0_i32_1 = arith.constant 0 : i32
    return %c0_i32, %c0_i32_0 : i32, i32
  }
  func.func @transform_3(%arg0: i32) -> (i32, i32) {
    %c0_i32 = arith.constant 0 : i32
    %c0_i32_0 = arith.constant 0 : i32
    %c0_i32_1 = arith.constant 0 : i32
    return %c0_i32, %c0_i32_0 : i32, i32
  }
  func.func @transform_4(%arg0: i32) -> (i32, i32) {
    %c0_i32 = arith.constant 0 : i32
    %c0_i32_0 = arith.constant 0 : i32
    return %arg0, %c0_i32 : i32, i32
  }
}

</mosaic_0001>

<llo_original>
// kernel: branch_forward_pallas.4
$region0: #{branch_forward_pallas.4}
  #allocation0 [shape = 'u32[]', space=smem, size = 0x4, offset = 0x4, fixed_abs, tag = 'smem constant byte address 0x4 - core index']
  #allocation1 [shape = 'u32[72,128]{1,0:T(1,128)}', space=vmem, size = 0x9000, scoped, tag = 'internal scratch']
  %s0 = inlined_call_operand.vmem [shape: f32[32,576], index: 0, kind: input, shape index: {}]
  %s1 = inlined_call_operand.vmem [shape: f32[576,128], index: 1, kind: input, shape index: {}]
  %s2 = inlined_call_operand.vmem [shape: f32[1,128], index: 2, kind: input, shape index: {}]
  %s3 = inlined_call_operand.vmem [shape: f32[1,128], index: 3, kind: input, shape index: {}]
  %s4 = inlined_call_operand.vmem [shape: f32[32,128], index: 4, kind: output, shape index: {}]
  %s5 = sld [smem:[#allocation0]]
  $region49: #{branch_forward_pallas.4} parent=0
    _
  %s7 = ssub.s32 1, %s5
  %s8 = scalar_select 0, %s7, %s5
  loop: start=0, step=1, limit=4
  $region2: #{branch_forward_pallas.4} parent=0 // loop_pre_header
    _
  $region3: #{branch_forward_pallas.4} parent=0 // loop_header
    %s10 = sphi 0, %s14
    %p11 = scmp.ge.s32.totalorder %s10, 4
    %s20 = sphi 0, %s22
    %s23 = sphi 0, %s20
    %s24 = sphi 0, %s23
    %s40 = sphi 0, %s24
    %s44 = sphi 0, %s44
    %s46 = sphi 0, %s44
    %s47 = sphi 0, %s46
    %s61 = sphi 0, %s47
    %s65 = sphi 0, %s65
    %s67 = sphi 0, %s65
    %s68 = sphi 0, %s67
    %s82 = sphi 0, %s68
    %s86 = sphi 0, %s86
    %s88 = sphi 0, %s86
    %s89 = sphi 0, %s88
    %s103 = sphi 0, %s89
    %s109 = sphi 0, %s111
    %s112 = sphi 0, %s109
    %s113 = sphi 0, %s112
    %s129 = sphi 0, %s113
  $region4: #{branch_forward_pallas.4} parent=0 // loop_header_branch
    %13 = sbr.rel (%p11) target = $region8
  $region5: #{branch_forward_pallas.4} parent=0 // loop_body
    %s15 = ssub.s32 %s10, 1
    %s16 = ssub.s32 %s10, 2
    %s17 = sadd.s32 %s10, 1
    %s18 = ssub.s32 %s10, %s17
    %p19 = scmp.eq.s32.totalorder %s18, 0
    %s21 = sadd.s32 %s20, 1
    %s22 = scalar_select %p19, %s20, %s21
    %p25 = pneg %p19
    %p26 = scmp.eq.s32.totalorder %s10, 1
    %p27 = por %p25, %p26
    %p28 = scmp.ne.s32.totalorder %s20, %s23
    %p29 = scmp.eq.s32.totalorder %s10, 0
    %p30 = por %p28, %p29
    %p31 = scmp.ne.s32.totalorder %s20, %s23
    %p32 = scmp.eq.s32.totalorder %s15, 1
    %p33 = por %p31, %p32
    %p34 = scmp.ne.s32.totalorder %s23, %s24
    %p35 = scmp.eq.s32.totalorder %s15, 0
    %p36 = por %p34, %p35
    %p37 = scmp.ne.s32.totalorder %s23, %s24
    %p38 = scmp.eq.s32.totalorder %s16, 1
    %p39 = por %p37, %p38
    %p41 = scmp.ne.s32.totalorder %s24, %s40
    %p42 = scmp.eq.s32.totalorder %s16, 0
    %p43 = por %p41, %p42
    %s45 = sadd.s32 %s44, 1
    %p48 = scmp.eq.s32.totalorder %s10, 1
    %p49 = scmp.ne.s32.totalorder %s44, %s46
    %p50 = scmp.eq.s32.totalorder %s10, 0
    %p51 = por %p49, %p50
    %p52 = scmp.ne.s32.totalorder %s44, %s46
    %p53 = scmp.eq.s32.totalorder %s15, 1
    %p54 = por %p52, %p53
    %p55 = scmp.ne.s32.totalorder %s46, %s47
    %p56 = scmp.eq.s32.totalorder %s15, 0
    %p57 = por %p55, %p56
    %p58 = scmp.ne.s32.totalorder %s46, %s47
    %p59 = scmp.eq.s32.totalorder %s16, 1
    %p60 = por %p58, %p59
    %p62 = scmp.ne.s32.totalorder %s47, %s61
    %p63 = scmp.eq.s32.totalorder %s16, 0
    %p64 = por %p62, %p63
    %s66 = sadd.s32 %s65, 1
    %p69 = scmp.eq.s32.totalorder %s10, 1
    %p70 = scmp.ne.s32.totalorder %s65, %s67
    %p71 = scmp.eq.s32.totalorder %s10, 0
    %p72 = por %p70, %p71
    %p73 = scmp.ne.s32.totalorder %s65, %s67
    %p74 = scmp.eq.s32.totalorder %s15, 1
    %p75 = por %p73, %p74
    %p76 = scmp.ne.s32.totalorder %s67, %s68
    %p77 = scmp.eq.s32.totalorder %s15, 0
    %p78 = por %p76, %p77
    %p79 = scmp.ne.s32.totalorder %s67, %s68
    %p80 = scmp.eq.s32.totalorder %s16, 1
    %p81 = por %p79, %p80
    %p83 = scmp.ne.s32.totalorder %s68, %s82
    %p84 = scmp.eq.s32.totalorder %s16, 0
    %p85 = por %p83, %p84
    %s87 = sadd.s32 %s86, 1
    %p90 = scmp.eq.s32.totalorder %s10, 1
    %p91 = scmp.ne.s32.totalorder %s86, %s88
    %p92 = scmp.eq.s32.totalorder %s10, 0
    %p93 = por %p91, %p92
    %p94 = scmp.ne.s32.totalorder %s86, %s88
    %p95 = scmp.eq.s32.totalorder %s15, 1
    %p96 = por %p94, %p95
    %p97 = scmp.ne.s32.totalorder %s88, %s89
    %p98 = scmp.eq.s32.totalorder %s15, 0
    %p99 = por %p97, %p98
    %p100 = scmp.ne.s32.totalorder %s88, %s89
    %p101 = scmp.eq.s32.totalorder %s16, 1
    %p102 = por %p100, %p101
    %p104 = scmp.ne.s32.totalorder %s89, %s103
    %p105 = scmp.eq.s32.totalorder %s16, 0
    %p106 = por %p104, %p105
    %s107 = ssub.s32 %s10, %s17
    %p108 = scmp.eq.s32.totalorder %s107, 0
    %s110 = sadd.s32 %s109, 1
    %s111 = scalar_select %p108, %s109, %s110
    %p114 = pneg %p108
    %p115 = scmp.eq.s32.totalorder %s10, 1
    %p116 = por %p114, %p115
    %p117 = scmp.ne.s32.totalorder %s109, %s112
    %p118 = scmp.eq.s32.totalorder %s10, 0
    %p119 = por %p117, %p118
    %p120 = scmp.ne.s32.totalorder %s109, %s112
    %p121 = scmp.eq.s32.totalorder %s15, 1
    %p122 = por %p120, %p121
    %p123 = scmp.ne.s32.totalorder %s112, %s113
    %p124 = scmp.eq.s32.totalorder %s15, 0
    %p125 = por %p123, %p124
    %p126 = scmp.ne.s32.totalorder %s112, %s113
    %p127 = scmp.eq.s32.totalorder %s16, 1
    %p128 = por %p126, %p127
    %p130 = scmp.ne.s32.totalorder %s113, %s129
    %p131 = scmp.eq.s32.totalorder %s16, 0
    %p132 = por %p130, %p131
    %p133 = scmp.le.s32.totalorder 1, %s10
    %p134 = scmp.lt.s32.totalorder %s10, 3
    %p135 = pnand %p133, %p134
    %p136 = pneg %p135
    // Predicated region
    $region9: #{branch_forward_pallas.4} parent=5 // pred_check
      _
    $region10: #{branch_forward_pallas.4} parent=5 // pred_check_branch
      %138 = sbr.rel (%p135) target = $region12
    $region11: #{branch_forward_pallas.4} parent=5 // pred_region
      %s139 = ssub.s32 %s10, 1
      // Predicated region
      $region13: #{branch_forward_pallas.4} parent=11 // pred_check
        %p140 = pneg %p57
      $region14: #{branch_forward_pallas.4} parent=11 // pred_check_branch
        %142 = sbr.rel (%p140) target = $region16
      $region15: #{branch_forward_pallas.4} parent=11 // pred_region
        _
      $region16: #{branch_forward_pallas.4} parent=11 // pred_fallthru
        _
      // Predicated region
      $region17: #{branch_forward_pallas.4} parent=11 // pred_check
        %p143 = pneg %p78
      $region18: #{branch_forward_pallas.4} parent=11 // pred_check_branch
        %145 = sbr.rel (%p143) target = $region20
      $region19: #{branch_forward_pallas.4} parent=11 // pred_region
        _
      $region20: #{branch_forward_pallas.4} parent=11 // pred_fallthru
        _
      // Predicated region
      $region21: #{branch_forward_pallas.4} parent=11 // pred_check
        %p146 = pneg %p99
      $region22: #{branch_forward_pallas.4} parent=11 // pred_check_branch
        %148 = sbr.rel (%p146) target = $region24
      $region23: #{branch_forward_pallas.4} parent=11 // pred_region
        _
      $region24: #{branch_forward_pallas.4} parent=11 // pred_fallthru
        _
    $region12: #{branch_forward_pallas.4} parent=5 // pred_fallthru
      _
    %p149 = scmp.lt.s32.totalorder %s10, 2
    // Predicated region
    $region25: #{branch_forward_pallas.4} parent=5 // pred_check
      %p150 = pneg %p149
    $region26: #{branch_forward_pallas.4} parent=5 // pred_check_branch
      %152 = sbr.rel (%p150) target = $region28
    $region27: #{branch_forward_pallas.4} parent=5 // pred_region
      // Predicated region
      $region29: #{branch_forward_pallas.4} parent=27 // pred_check
        %p153 = pneg %p30
      $region30: #{branch_forward_pallas.4} parent=27 // pred_check_branch
        %155 = sbr.rel (%p153) target = $region32
      $region31: #{branch_forward_pallas.4} parent=27 // pred_region
        %s156 = smul.u32 2, %s10
        %p157 = scmp.lt.s32.totalorder %s156, 3
        %s158 = scalar_select %p157, %s156, 3
        %s159 = smul.addr %s158, 5
        %s160 = smul.addr %s159, 8
        %s161 = scalar_lea.vmem %s0, %s160
        %s162 = smul.u32 2, %s10
      $region32: #{branch_forward_pallas.4} parent=27 // pred_fallthru
        _
    $region28: #{branch_forward_pallas.4} parent=5 // pred_fallthru
      _
    %p163 = scmp.le.s32.totalorder 1, %s10
    %p164 = scmp.lt.s32.totalorder %s10, 3
    %p165 = pnand %p163, %p164
    %p166 = pneg %p165
    // Predicated region
    $region33: #{branch_forward_pallas.4} parent=5 // pred_check
      _
    $region34: #{branch_forward_pallas.4} parent=5 // pred_check_branch
      %168 = sbr.rel (%p165) target = $region36
    $region35: #{branch_forward_pallas.4} parent=5 // pred_region
      %s169 = ssub.s32 %s10, 1
      %s170 = smul.u32 2, %s15
      %p171 = scmp.lt.s32.totalorder %s170, 3
      %s172 = scalar_select %p171, %s170, 3
      %s173 = smul.addr %s172, 5
      %s174 = smul.addr %s173, 8
      %s175 = scalar_lea.vmem %s0, %s174
      %p176 = pneg %p36
      %p177 = pneg %p33
      %p178 = pneg %p57
      %p179 = pneg %p54
      %p180 = pneg %p78
      %p181 = pneg %p75
      %p182 = pneg %p99
      %p183 = pneg %p96
      %p184 = pneg %p125
      %p185 = pneg %p122
      %s186 = smul.u32 2, %s15
      %p187 = scmp.lt.s32.totalorder %s186, 3
      %s188 = scalar_select %p187, %s186, 3
      %s189 = smul.addr %s188, 8
      %s190 = scalar_lea.vmem %s4, %s189
      %s191 = smul.u32 2, %s15
      %p192 = scmp.lt.s32.totalorder %s191, 3
      %s193 = scalar_select %p192, %s191, 3
      %s194 = smul.addr %s193, 5
      %s195 = smul.addr %s194, 8
      %s196 = scalar_lea.vmem %s0, %s195
      %s197 = smul.u32 2, %s15
      %s198 = smul.u32 2, %s15
      %p199 = scmp.lt.s32.totalorder %s198, 3
      %s200 = scalar_select %p199, %s198, 3
      %s201 = smul.addr %s200, 8
      %s202 = scalar_lea.vmem %s4, %s201
      %s203 = smul.u32 2, %s15
      %v204 = vld [vmem:[%s196] sm:$0xff]
      %v205 = vld [vmem:[%s196 + $0x8] sm:$0xff]
      %v206 = vld [vmem:[%s196 + $0x10] sm:$0xff]
      %v207 = vld [vmem:[%s196 + $0x18] sm:$0xff]
      %v208 = vld [vmem:[%s196 + $0x20] sm:$0xff]
      %v209 = vld [vmem:[%s196 + $0x28] sm:$0xff]
      %v210 = vld [vmem:[%s196 + $0x30] sm:$0xff]
      %v211 = vld [vmem:[%s196 + $0x38] sm:$0xff]
      %v212 = vld [vmem:[%s196 + $0x40] sm:$0xff]
      %v213 = vld [vmem:[%s196 + $0x48] sm:$0xff]
      %v214 = vld [vmem:[%s1] sm:$0xff]
      %v215 = vld [vmem:[%s1 + $0x8] sm:$0xff]
      %v216 = vld [vmem:[%s1 + $0x10] sm:$0xff]
      %v217 = vld [vmem:[%s1 + $0x18] sm:$0xff]
      %v218 = vld [vmem:[%s1 + $0x20] sm:$0xff]
      %v219 = vld [vmem:[%s1 + $0x28] sm:$0xff]
      %v220 = vld [vmem:[%s1 + $0x30] sm:$0xff]
      %v221 = vld [vmem:[%s1 + $0x38] sm:$0xff]
      %v222 = vld [vmem:[%s1 + $0x40] sm:$0xff]
      %v223 = vld [vmem:[%s1 + $0x48] sm:$0xff]
      %v224 = vld [vmem:[%s1 + $0x50] sm:$0xff]
      %v225 = vld [vmem:[%s1 + $0x58] sm:$0xff]
      %v226 = vld [vmem:[%s1 + $0x60] sm:$0xff]
      %v227 = vld [vmem:[%s1 + $0x68] sm:$0xff]
      %v228 = vld [vmem:[%s1 + $0x70] sm:$0xff]
      %v229 = vld [vmem:[%s1 + $0x78] sm:$0xff]
      %v230 = vld [vmem:[%s1 + $0x80] sm:$0xff]
      %v231 = vld [vmem:[%s1 + $0x88] sm:$0xff]
      %v232 = vld [vmem:[%s1 + $0x90] sm:$0xff]
      %v233 = vld [vmem:[%s1 + $0x98] sm:$0xff]
      %v234 = vld [vmem:[%s1 + $0xa0] sm:$0xff]
      %v235 = vld [vmem:[%s1 + $0xa8] sm:$0xff]
      %v236 = vld [vmem:[%s1 + $0xb0] sm:$0xff]
      %v237 = vld [vmem:[%s1 + $0xb8] sm:$0xff]
      %v238 = vld [vmem:[%s1 + $0xc0] sm:$0xff]
      %v239 = vld [vmem:[%s1 + $0xc8] sm:$0xff]
      %v240 = vld [vmem:[%s1 + $0xd0] sm:$0xff]
      %v241 = vld [vmem:[%s1 + $0xd8] sm:$0xff]
      %v242 = vld [vmem:[%s1 + $0xe0] sm:$0xff]
      %v243 = vld [vmem:[%s1 + $0xe8] sm:$0xff]
      %v244 = vld [vmem:[%s1 + $0xf0] sm:$0xff]
      %v245 = vld [vmem:[%s1 + $0xf8] sm:$0xff]
      %v246 = vld [vmem:[%s1 + $0x100] sm:$0xff]
      %v247 = vld [vmem:[%s1 + $0x108] sm:$0xff]
      %v248 = vld [vmem:[%s1 + $0x110] sm:$0xff]
      %v249 = vld [vmem:[%s1 + $0x118] sm:$0xff]
      %v250 = vld [vmem:[%s1 + $0x120] sm:$0xff]
      %v251 = vld [vmem:[%s1 + $0x128] sm:$0xff]
      %v252 = vld [vmem:[%s1 + $0x130] sm:$0xff]
      %v253 = vld [vmem:[%s1 + $0x138] sm:$0xff]
      %v254 = vld [vmem:[%s1 + $0x140] sm:$0xff]
      %v255 = vld [vmem:[%s1 + $0x148] sm:$0xff]
      %v256 = vld [vmem:[%s1 + $0x150] sm:$0xff]
      %v257 = vld [vmem:[%s1 + $0x158] sm:$0xff]
      %v258 = vld [vmem:[%s1 + $0x160] sm:$0xff]
      %v259 = vld [vmem:[%s1 + $0x168] sm:$0xff]
      %v260 = vld [vmem:[%s1 + $0x170] sm:$0xff]
      %v261 = vld [vmem:[%s1 + $0x178] sm:$0xff]
      %v262 = vld [vmem:[%s1 + $0x180] sm:$0xff]
      %v263 = vld [vmem:[%s1 + $0x188] sm:$0xff]
      %v264 = vld [vmem:[%s1 + $0x190] sm:$0xff]
      %v265 = vld [vmem:[%s1 + $0x198] sm:$0xff]
      %v266 = vld [vmem:[%s1 + $0x1a0] sm:$0xff]
      %v267 = vld [vmem:[%s1 + $0x1a8] sm:$0xff]
      %v268 = vld [vmem:[%s1 + $0x1b0] sm:$0xff]
      %v269 = vld [vmem:[%s1 + $0x1b8] sm:$0xff]
      %v270 = vld [vmem:[%s1 + $0x1c0] sm:$0xff]
      %v271 = vld [vmem:[%s1 + $0x1c8] sm:$0xff]
      %v272 = vld [vmem:[%s1 + $0x1d0] sm:$0xff]
      %v273 = vld [vmem:[%s1 + $0x1d8] sm:$0xff]
      %v274 = vld [vmem:[%s1 + $0x1e0] sm:$0xff]
      %v275 = vld [vmem:[%s1 + $0x1e8] sm:$0xff]
      %v276 = vld [vmem:[%s1 + $0x1f0] sm:$0xff]
      %v277 = vld [vmem:[%s1 + $0x1f8] sm:$0xff]
      %v278 = vld [vmem:[%s1 + $0x200] sm:$0xff]
      %v279 = vld [vmem:[%s1 + $0x208] sm:$0xff]
      %v280 = vld [vmem:[%s1 + $0x210] sm:$0xff]
      %v281 = vld [vmem:[%s1 + $0x218] sm:$0xff]
      %v282 = vld [vmem:[%s1 + $0x220] sm:$0xff]
      %v283 = vld [vmem:[%s1 + $0x228] sm:$0xff]
      %v284 = vld [vmem:[%s1 + $0x230] sm:$0xff]
      %v285 = vld [vmem:[%s1 + $0x238] sm:$0xff]
      %vm286 = vcmask 523264
      %v288 = vsel %vm286, %v208, 0
      %v291 = vsel %vm286, %v213, 0
      %293 = vmatpush.msra.mxu0 %v229
      %294 = vmatpush.msra.mxu0 %v228
      %295 = vmatpush.msra.mxu0 %v227
      %296 = vmatpush.msra.mxu0 %v226
      %297 = vmatpush.msra.mxu0 %v225
      %298 = vmatpush.msra.mxu0 %v224
      %299 = vmatpush.msra.mxu0 %v223
      %300 = vmatpush.msra.mxu0 %v222
      %301 = vmatpush.msra.mxu0 %v221
      %302 = vmatpush.msra.mxu0 %v220
      %303 = vmatpush.msra.mxu0 %v219
      %304 = vmatpush.msra.mxu0 %v218
      %305 = vmatpush.msra.mxu0 %v217
      %306 = vmatpush.msra.mxu0 %v216
      %307 = vmatpush.msra.mxu0 %v215
      %308 = vmatpush.msra.mxu0 %v214
      %309 = vmatmul.f32.gmra.mxu0 %v204
      %v310 = vpop.f32.mrf.mxu0
      %v311 = vadd.f32 0.0, %v310
      %312 = vmatmul.f32.gmra.mxu0 %v209
      %v313 = vpop.f32.mrf.mxu0
      %v314 = vadd.f32 0.0, %v313
      %315 = vdwg.mxu0
      %316 = vmatpush.msra.mxu0 %v245
      %317 = vmatpush.msra.mxu0 %v244
      %318 = vmatpush.msra.mxu0 %v243
      %319 = vmatpush.msra.mxu0 %v242
      %320 = vmatpush.msra.mxu0 %v241
      %321 = vmatpush.msra.mxu0 %v240
      %322 = vmatpush.msra.mxu0 %v239
      %323 = vmatpush.msra.mxu0 %v238
      %324 = vmatpush.msra.mxu0 %v237
      %325 = vmatpush.msra.mxu0 %v236
      %326 = vmatpush.msra.mxu0 %v235
      %327 = vmatpush.msra.mxu0 %v234
      %328 = vmatpush.msra.mxu0 %v233
      %329 = vmatpush.msra.mxu0 %v232
      %330 = vmatpush.msra.mxu0 %v231
      %331 = vmatpush.msra.mxu0 %v230
      %332 = vmatmul.f32.gmra.mxu0 %v205
      %v333 = vpop.f32.mrf.mxu0
      %v334 = vadd.f32 %v311, %v333
      %335 = vmatmul.f32.gmra.mxu0 %v210
      %v336 = vpop.f32.mrf.mxu0
      %v337 = vadd.f32 %v314, %v336
      %338 = vdwg.mxu0
      %339 = vmatpush.msra.mxu0 %v261
      %340 = vmatpush.msra.mxu0 %v260
      %341 = vmatpush.msra.mxu0 %v259
      %342 = vmatpush.msra.mxu0 %v258
      %343 = vmatpush.msra.mxu0 %v257
      %344 = vmatpush.msra.mxu0 %v256
      %345 = vmatpush.msra.mxu0 %v255
      %346 = vmatpush.msra.mxu0 %v254
      %347 = vmatpush.msra.mxu0 %v253
      %348 = vmatpush.msra.mxu0 %v252
      %349 = vmatpush.msra.mxu0 %v251
      %350 = vmatpush.msra.mxu0 %v250
      %351 = vmatpush.msra.mxu0 %v249
      %352 = vmatpush.msra.mxu0 %v248
      %353 = vmatpush.msra.mxu0 %v247
      %354 = vmatpush.msra.mxu0 %v246
      %355 = vmatmul.f32.gmra.mxu0 %v206
      %v356 = vpop.f32.mrf.mxu0
      %v357 = vadd.f32 %v334, %v356
      %358 = vmatmul.f32.gmra.mxu0 %v211
      %v359 = vpop.f32.mrf.mxu0
      %v360 = vadd.f32 %v337, %v359
      %361 = vdwg.mxu0
      %362 = vmatpush.msra.mxu0 %v277
      %363 = vmatpush.msra.mxu0 %v276
      %364 = vmatpush.msra.mxu0 %v275
      %365 = vmatpush.msra.mxu0 %v274
      %366 = vmatpush.msra.mxu0 %v273
      %367 = vmatpush.msra.mxu0 %v272
      %368 = vmatpush.msra.mxu0 %v271
      %369 = vmatpush.msra.mxu0 %v270
      %370 = vmatpush.msra.mxu0 %v269
      %371 = vmatpush.msra.mxu0 %v268
      %372 = vmatpush.msra.mxu0 %v267
      %373 = vmatpush.msra.mxu0 %v266
      %374 = vmatpush.msra.mxu0 %v265
      %375 = vmatpush.msra.mxu0 %v264
      %376 = vmatpush.msra.mxu0 %v263
      %377 = vmatpush.msra.mxu0 %v262
      %378 = vmatmul.f32.gmra.mxu0 %v207
      %v379 = vpop.f32.mrf.mxu0
      %v380 = vadd.f32 %v357, %v379
      %381 = vmatmul.f32.gmra.mxu0 %v212
      %v382 = vpop.f32.mrf.mxu0
      %v383 = vadd.f32 %v360, %v382
      %384 = vdwg.mxu0
      %385 = vmatpush.msra.mxu0 0.0
      %386 = vmatpush.msra.mxu0 0.0
      %387 = vmatpush.msra.mxu0 0.0
      %388 = vmatpush.msra.mxu0 0.0
      %389 = vmatpush.msra.mxu0 0.0
      %390 = vmatpush.msra.mxu0 0.0
      %391 = vmatpush.msra.mxu0 0.0
      %392 = vmatpush.msra.mxu0 0.0
      %393 = vmatpush.msra.mxu0 %v285
      %394 = vmatpush.msra.mxu0 %v284
      %395 = vmatpush.msra.mxu0 %v283
      %396 = vmatpush.msra.mxu0 %v282
      %397 = vmatpush.msra.mxu0 %v281
      %398 = vmatpush.msra.mxu0 %v280
      %399 = vmatpush.msra.mxu0 %v279
      %400 = vmatpush.msra.mxu0 %v278
      %401 = vmatmul.f32.gmra.mxu0 %v288
      %v402 = vpop.f32.mrf.mxu0
      %v403 = vadd.f32 %v380, %v402
      %404 = vmatmul.f32.gmra.mxu0 %v291
      %v405 = vpop.f32.mrf.mxu0
      %v406 = vadd.f32 %v383, %v405
      %407 = vdwg.mxu0
      %v408 = vld [vmem:[%s2] sm:$0x1]
      %v410 = vperm.slane %v408, 0
      %v412 = vmul.f32 %v403, %v410
      %v413 = vmul.f32 %v406, %v410
      %v414 = vld [vmem:[%s3] sm:$0x1]
      %v416 = vperm.slane %v414, 0
      %v418 = vadd.f32 %v412, %v416
      %v419 = vadd.f32 %v413, %v416
      %v420 = vmul.f32 %v418, 0.5
      %v421 = vmul.f32 %v419, 0.5
      %v422 = vmul.f32 %v418, 0.70710677
      %v423 = vmul.f32 %v419, 0.70710677
      %vm424 = vcmp.ge.f32.partialorder %v422, 0.0
      %vm425 = vcmp.ge.f32.partialorder %v423, 0.0
      %v426 = vsel %vm424, 1.0, -1.0
      %v427 = vsel %vm425, 1.0, -1.0
      %v428 = vand.u32 2147483647, %v422
      %v429 = vand.u32 2147483647, %v423
      %v430 = vmul.f32 %v428, 0.3275911
      %v431 = vmul.f32 %v429, 0.3275911
      %v432 = vadd.f32 %v430, 1.0
      %v433 = vadd.f32 %v431, 1.0
      %v434 = vrcp.pop %v432
      %v435 = vmul.f32 %v432, %v434
      %v436 = vsub.f32 1.0, %v435
      %v437 = vmul.f32 %v434, %v436
      %v438 = vadd.f32 %v434, %v437
      %vm439 = vweird.f32 %v432
      %vm440 = vweird.f32 %v434
      %vm441 = vmor %vm439, %vm440
      %v442 = vsel %vm441, %v434, %v438
      %v443 = vand.u32 2147483647, %v432
      %vm444 = vcmp.eq.f32.partialorder %v443, 8.507059e+37
      %v445 = vand.u32 %v432, 2147483648
      %v446 = vor.u32 1.1754944e-38, %v445
      %v447 = vsel %vm444, %v446, %v442
      %v448 = vmul.f32 1.0, %v447
      %v449 = vrcp.pop %v433
      %v450 = vmul.f32 %v433, %v449
      %v451 = vsub.f32 1.0, %v450
      %v452 = vmul.f32 %v449, %v451
      %v453 = vadd.f32 %v449, %v452
      %vm454 = vweird.f32 %v433
      %vm455 = vweird.f32 %v449
      %vm456 = vmor %vm454, %vm455
      %v457 = vsel %vm456, %v449, %v453
      %v458 = vand.u32 2147483647, %v433
      %vm459 = vcmp.eq.f32.partialorder %v458, 8.507059e+37
      %v460 = vand.u32 %v433, 2147483648
      %v461 = vor.u32 1.1754944e-38, %v460
      %v462 = vsel %vm459, %v461, %v457
      %v463 = vmul.f32 1.0, %v462
      %v464 = vmul.f32 %v448, 1.0614054
      %v465 = vmul.f32 %v463, 1.0614054
      %v466 = vadd.f32 %v464, -1.4531521
      %v467 = vadd.f32 %v465, -1.4531521
      %v468 = vmul.f32 %v466, %v448
      %v469 = vmul.f32 %v467, %v463
      %v470 = vadd.f32 %v468, 1.4214138
      %v471 = vadd.f32 %v469, 1.4214138
      %v472 = vmul.f32 %v470, %v448
      %v473 = vmul.f32 %v471, %v463
      %v474 = vadd.f32 %v472, -0.28449672
      %v475 = vadd.f32 %v473, -0.28449672
      %v476 = vmul.f32 %v474, %v448
      %v477 = vmul.f32 %v475, %v463
      %v478 = vadd.f32 %v476, 0.2548296
      %v479 = vadd.f32 %v477, 0.2548296
      %v480 = vmul.f32 %v478, %v448
      %v481 = vmul.f32 %v479, %v463
      %v482 = vsub.f32 0.0, %v428
      %v483 = vsub.f32 0.0, %v429
      %v484 = vmul.f32 %v482, %v428
      %v485 = vmul.f32 %v483, %v429
      %v486 = vmul.f32 %v484, 1.442695
      %v487 = vpow.pop %v486
      %v488 = vmul.f32 %v485, 1.442695
      %v489 = vpow.pop %v488
      %v490 = vmul.f32 %v480, %v487
      %v491 = vmul.f32 %v481, %v489
      %v492 = vsub.f32 1.0, %v490
      %v493 = vsub.f32 1.0, %v491
      %v494 = vmul.f32 %v426, %v492
      %v495 = vmul.f32 %v427, %v493
      %v496 = vadd.f32 %v494, 1.0
      %v497 = vadd.f32 %v495, 1.0
      %v498 = vmul.f32 %v420, %v496
      %v499 = vmul.f32 %v421, %v497
      %500 = vst [vmem:[%s202] sm:$0xff] %v498
      %501 = vst [vmem:[%s202 + $0x8] sm:$0xff] %v499
      %s502 = smul.u32 2, %s15
      %p503 = scmp.lt.s32.totalorder %s502, 3
      %s504 = scalar_select %p503, %s502, 3
      %s505 = smul.addr %s504, 8
      %s506 = scalar_lea.vmem %s4, %s505
      // Predicated region
      $region37: #{branch_forward_pallas.4} parent=35 // pred_check
        %p507 = pneg %p122
      $region38: #{branch_forward_pallas.4} parent=35 // pred_check_branch
        %509 = sbr.rel (%p507) target = $region40
      $region39: #{branch_forward_pallas.4} parent=35 // pred_region
        %s510 = smul.u32 2, %s15
      $region40: #{branch_forward_pallas.4} parent=35 // pred_fallthru
        _
    $region36: #{branch_forward_pallas.4} parent=5 // pred_fallthru
      _
    %p511 = scmp.le.s32.totalorder 2, %s10
    // Predicated region
    $region41: #{branch_forward_pallas.4} parent=5 // pred_check
      %p512 = pneg %p511
    $region42: #{branch_forward_pallas.4} parent=5 // pred_check_branch
      %514 = sbr.rel (%p512) target = $region44
    $region43: #{branch_forward_pallas.4} parent=5 // pred_region
      %s515 = ssub.s32 %s10, 2
      // Predicated region
      $region45: #{branch_forward_pallas.4} parent=43 // pred_check
        %p516 = pneg %p128
      $region46: #{branch_forward_pallas.4} parent=43 // pred_check_branch
        %518 = sbr.rel (%p516) target = $region48
      $region47: #{branch_forward_pallas.4} parent=43 // pred_region
        %s519 = smul.u32 2, %s16
        %p520 = scmp.lt.s32.totalorder %s519, 3
        %s521 = scalar_select %p520, %s519, 3
        %s522 = smul.addr %s521, 8
        %s523 = scalar_lea.vmem %s4, %s522
      $region48: #{branch_forward_pallas.4} parent=43 // pred_fallthru
        _
    $region44: #{branch_forward_pallas.4} parent=5 // pred_fallthru
      _
  $region6: #{branch_forward_pallas.4} parent=0 // loop_footer
    %s14 = sadd.s32 1, %s10
  $region7: #{branch_forward_pallas.4} parent=0 // loop_footer_branch
    %9 = sbr.rel target = $region3
  $region8: #{branch_forward_pallas.4} parent=0 // loop_exit
    _

// kernel: branch_forward_pallas.3
$region0: #{branch_forward_pallas.3}
  #allocation0 [shape = 'u32[]', space=smem, size = 0x4, offset = 0x4, fixed_abs, tag = 'smem constant byte address 0x4 - core index']
  #allocation1 [shape = 'u32[72,128]{1,0:T(1,128)}', space=vmem, size = 0x9000, scoped, tag = 'internal scratch']
  %s0 = inlined_call_operand.vmem [shape: f32[128,56], index: 0, kind: input, shape index: {}]
  %s1 = inlined_call_operand.vmem [shape: f32[56,64], index: 1, kind: input, shape index: {}]
  %s2 = inlined_call_operand.vmem [shape: f32[1,64], index: 2, kind: input, shape index: {}]
  %s3 = inlined_call_operand.vmem [shape: f32[1,64], index: 3, kind: input, shape index: {}]
  %s4 = inlined_call_operand.vmem [shape: f32[128,64], index: 4, kind: output, shape index: {}]
  %s5 = sld [smem:[#allocation0]]
  $region49: #{branch_forward_pallas.3} parent=0
    _
  %s7 = ssub.s32 1, %s5
  %s8 = scalar_select 0, %s7, %s5
  loop: start=0, step=1, limit=4
  $region2: #{branch_forward_pallas.3} parent=0 // loop_pre_header
    _
  $region3: #{branch_forward_pallas.3} parent=0 // loop_header
    %s10 = sphi 0, %s14
    %p11 = scmp.ge.s32.totalorder %s10, 4
    %s20 = sphi 0, %s22
    %s23 = sphi 0, %s20
    %s24 = sphi 0, %s23
    %s40 = sphi 0, %s24
    %s44 = sphi 0, %s44
    %s46 = sphi 0, %s44
    %s47 = sphi 0, %s46
    %s61 = sphi 0, %s47
    %s65 = sphi 0, %s65
    %s67 = sphi 0, %s65
    %s68 = sphi 0, %s67
    %s82 = sphi 0, %s68
    %s86 = sphi 0, %s86
    %s88 = sphi 0, %s86
    %s89 = sphi 0, %s88
    %s103 = sphi 0, %s89
    %s109 = sphi 0, %s111
    %s112 = sphi 0, %s109
    %s113 = sphi 0, %s112
    %s129 = sphi 0, %s113
  $region4: #{branch_forward_pallas.3} parent=0 // loop_header_branch
    %13 = sbr.rel (%p11) target = $region8
  $region5: #{branch_forward_pallas.3} parent=0 // loop_body
    %s15 = ssub.s32 %s10, 1
    %s16 = ssub.s32 %s10, 2
    %s17 = sadd.s32 %s10, 1
    %s18 = ssub.s32 %s10, %s17
    %p19 = scmp.eq.s32.totalorder %s18, 0
    %s21 = sadd.s32 %s20, 1
    %s22 = scalar_select %p19, %s20, %s21
    %p25 = pneg %p19
    %p26 = scmp.eq.s32.totalorder %s10, 1
    %p27 = por %p25, %p26
    %p28 = scmp.ne.s32.totalorder %s20, %s23
    %p29 = scmp.eq.s32.totalorder %s10, 0
    %p30 = por %p28, %p29
    %p31 = scmp.ne.s32.totalorder %s20, %s23
    %p32 = scmp.eq.s32.totalorder %s15, 1
    %p33 = por %p31, %p32
    %p34 = scmp.ne.s32.totalorder %s23, %s24
    %p35 = scmp.eq.s32.totalorder %s15, 0
    %p36 = por %p34, %p35
    %p37 = scmp.ne.s32.totalorder %s23, %s24
    %p38 = scmp.eq.s32.totalorder %s16, 1
    %p39 = por %p37, %p38
    %p41 = scmp.ne.s32.totalorder %s24, %s40
    %p42 = scmp.eq.s32.totalorder %s16, 0
    %p43 = por %p41, %p42
    %s45 = sadd.s32 %s44, 1
    %p48 = scmp.eq.s32.totalorder %s10, 1
    %p49 = scmp.ne.s32.totalorder %s44, %s46
    %p50 = scmp.eq.s32.totalorder %s10, 0
    %p51 = por %p49, %p50
    %p52 = scmp.ne.s32.totalorder %s44, %s46
    %p53 = scmp.eq.s32.totalorder %s15, 1
    %p54 = por %p52, %p53
    %p55 = scmp.ne.s32.totalorder %s46, %s47
    %p56 = scmp.eq.s32.totalorder %s15, 0
    %p57 = por %p55, %p56
    %p58 = scmp.ne.s32.totalorder %s46, %s47
    %p59 = scmp.eq.s32.totalorder %s16, 1
    %p60 = por %p58, %p59
    %p62 = scmp.ne.s32.totalorder %s47, %s61
    %p63 = scmp.eq.s32.totalorder %s16, 0
    %p64 = por %p62, %p63
    %s66 = sadd.s32 %s65, 1
    %p69 = scmp.eq.s32.totalorder %s10, 1
    %p70 = scmp.ne.s32.totalorder %s65, %s67
    %p71 = scmp.eq.s32.totalorder %s10, 0
    %p72 = por %p70, %p71
    %p73 = scmp.ne.s32.totalorder %s65, %s67
    %p74 = scmp.eq.s32.totalorder %s15, 1
    %p75 = por %p73, %p74
    %p76 = scmp.ne.s32.totalorder %s67, %s68
    %p77 = scmp.eq.s32.totalorder %s15, 0
    %p78 = por %p76, %p77
    %p79 = scmp.ne.s32.totalorder %s67, %s68
    %p80 = scmp.eq.s32.totalorder %s16, 1
    %p81 = por %p79, %p80
    %p83 = scmp.ne.s32.totalorder %s68, %s82
    %p84 = scmp.eq.s32.totalorder %s16, 0
    %p85 = por %p83, %p84
    %s87 = sadd.s32 %s86, 1
    %p90 = scmp.eq.s32.totalorder %s10, 1
    %p91 = scmp.ne.s32.totalorder %s86, %s88
    %p92 = scmp.eq.s32.totalorder %s10, 0
    %p93 = por %p91, %p92
    %p94 = scmp.ne.s32.totalorder %s86, %s88
    %p95 = scmp.eq.s32.totalorder %s15, 1
    %p96 = por %p94, %p95
    %p97 = scmp.ne.s32.totalorder %s88, %s89
    %p98 = scmp.eq.s32.totalorder %s15, 0
    %p99 = por %p97, %p98
    %p100 = scmp.ne.s32.totalorder %s88, %s89
    %p101 = scmp.eq.s32.totalorder %s16, 1
    %p102 = por %p100, %p101
    %p104 = scmp.ne.s32.totalorder %s89, %s103
    %p105 = scmp.eq.s32.totalorder %s16, 0
    %p106 = por %p104, %p105
    %s107 = ssub.s32 %s10, %s17
    %p108 = scmp.eq.s32.totalorder %s107, 0
    %s110 = sadd.s32 %s109, 1
    %s111 = scalar_select %p108, %s109, %s110
    %p114 = pneg %p108
    %p115 = scmp.eq.s32.totalorder %s10, 1
    %p116 = por %p114, %p115
    %p117 = scmp.ne.s32.totalorder %s109, %s112
    %p118 = scmp.eq.s32.totalorder %s10, 0
    %p119 = por %p117, %p118
    %p120 = scmp.ne.s32.totalorder %s109, %s112
    %p121 = scmp.eq.s32.totalorder %s15, 1
    %p122 = por %p120, %p121
    %p123 = scmp.ne.s32.totalorder %s112, %s113
    %p124 = scmp.eq.s32.totalorder %s15, 0
    %p125 = por %p123, %p124
    %p126 = scmp.ne.s32.totalorder %s112, %s113
    %p127 = scmp.eq.s32.totalorder %s16, 1
    %p128 = por %p126, %p127
    %p130 = scmp.ne.s32.totalorder %s113, %s129
    %p131 = scmp.eq.s32.totalorder %s16, 0
    %p132 = por %p130, %p131
    %p133 = scmp.le.s32.totalorder 1, %s10
    %p134 = scmp.lt.s32.totalorder %s10, 3
    %p135 = pnand %p133, %p134
    %p136 = pneg %p135
    // Predicated region
    $region9: #{branch_forward_pallas.3} parent=5 // pred_check
      _
    $region10: #{branch_forward_pallas.3} parent=5 // pred_check_branch
      %138 = sbr.rel (%p135) target = $region12
    $region11: #{branch_forward_pallas.3} parent=5 // pred_region
      %s139 = ssub.s32 %s10, 1
      // Predicated region
      $region13: #{branch_forward_pallas.3} parent=11 // pred_check
        %p140 = pneg %p57
      $region14: #{branch_forward_pallas.3} parent=11 // pred_check_branch
        %142 = sbr.rel (%p140) target = $region16
      $region15: #{branch_forward_pallas.3} parent=11 // pred_region
        _
      $region16: #{branch_forward_pallas.3} parent=11 // pred_fallthru
        _
      // Predicated region
      $region17: #{branch_forward_pallas.3} parent=11 // pred_check
        %p143 = pneg %p78
      $region18: #{branch_forward_pallas.3} parent=11 // pred_check_branch
        %145 = sbr.rel (%p143) target = $region20
      $region19: #{branch_forward_pallas.3} parent=11 // pred_region
        _
      $region20: #{branch_forward_pallas.3} parent=11 // pred_fallthru
        _
      // Predicated region
      $region21: #{branch_forward_pallas.3} parent=11 // pred_check
        %p146 = pneg %p99
      $region22: #{branch_forward_pallas.3} parent=11 // pred_check_branch
        %148 = sbr.rel (%p146) target = $region24
      $region23: #{branch_forward_pallas.3} parent=11 // pred_region
        _
      $region24: #{branch_forward_pallas.3} parent=11 // pred_fallthru
        _
    $region12: #{branch_forward_pallas.3} parent=5 // pred_fallthru
      _
    %p149 = scmp.lt.s32.totalorder %s10, 2
    // Predicated region
    $region25: #{branch_forward_pallas.3} parent=5 // pred_check
      %p150 = pneg %p149
    $region26: #{branch_forward_pallas.3} parent=5 // pred_check_branch
      %152 = sbr.rel (%p150) target = $region28
    $region27: #{branch_forward_pallas.3} parent=5 // pred_region
      // Predicated region
      $region29: #{branch_forward_pallas.3} parent=27 // pred_check
        %p153 = pneg %p30
      $region30: #{branch_forward_pallas.3} parent=27 // pred_check_branch
        %155 = sbr.rel (%p153) target = $region32
      $region31: #{branch_forward_pallas.3} parent=27 // pred_region
        %s156 = smul.u32 8, %s10
        %p157 = scmp.lt.s32.totalorder %s156, 15
        %s158 = scalar_select %p157, %s156, 15
        %s159 = smul.addr %s158, 8
        %s160 = scalar_lea.vmem %s0, %s159
        %s161 = smul.u32 8, %s10
      $region32: #{branch_forward_pallas.3} parent=27 // pred_fallthru
        _
    $region28: #{branch_forward_pallas.3} parent=5 // pred_fallthru
      _
    %p162 = scmp.le.s32.totalorder 1, %s10
    %p163 = scmp.lt.s32.totalorder %s10, 3
    %p164 = pnand %p162, %p163
    %p165 = pneg %p164
    // Predicated region
    $region33: #{branch_forward_pallas.3} parent=5 // pred_check
      _
    $region34: #{branch_forward_pallas.3} parent=5 // pred_check_branch
      %167 = sbr.rel (%p164) target = $region36
    $region35: #{branch_forward_pallas.3} parent=5 // pred_region
      %s168 = ssub.s32 %s10, 1
      %s169 = smul.u32 8, %s15
      %p170 = scmp.lt.s32.totalorder %s169, 15
      %s171 = scalar_select %p170, %s169, 15
      %s172 = smul.addr %s171, 8
      %s173 = scalar_lea.vmem %s0, %s172
      %p174 = pneg %p36
      %p175 = pneg %p33
      %p176 = pneg %p57
      %p177 = pneg %p54
      %p178 = pneg %p78
      %p179 = pneg %p75
      %p180 = pneg %p99
      %p181 = pneg %p96
      %p182 = pneg %p125
      %p183 = pneg %p122
      %s184 = smul.u32 8, %s15
      %p185 = scmp.lt.s32.totalorder %s184, 15
      %s186 = scalar_select %p185, %s184, 15
      %s187 = smul.addr %s186, 8
      %s188 = scalar_lea.vmem %s4, %s187
      %s189 = smul.u32 8, %s15
      %p190 = scmp.lt.s32.totalorder %s189, 15
      %s191 = scalar_select %p190, %s189, 15
      %s192 = smul.addr %s191, 8
      %s193 = scalar_lea.vmem %s0, %s192
      %s194 = smul.u32 8, %s15
      %s195 = smul.u32 8, %s15
      %p196 = scmp.lt.s32.totalorder %s195, 15
      %s197 = scalar_select %p196, %s195, 15
      %s198 = smul.addr %s197, 8
      %s199 = scalar_lea.vmem %s4, %s198
      %s200 = smul.u32 8, %s15
      %v201 = vld [vmem:[%s193] sm:$0xff]
      %v202 = vld [vmem:[%s193 + $0x8] sm:$0xff]
      %v203 = vld [vmem:[%s193 + $0x10] sm:$0xff]
      %v204 = vld [vmem:[%s193 + $0x18] sm:$0xff]
      %v205 = vld [vmem:[%s193 + $0x20] sm:$0xff]
      %v206 = vld [vmem:[%s193 + $0x28] sm:$0xff]
      %v207 = vld [vmem:[%s193 + $0x30] sm:$0xff]
      %v208 = vld [vmem:[%s193 + $0x38] sm:$0xff]
      %v209 = vld [vmem:[%s1] sm:$0xff]
      %v210 = vld [vmem:[%s1 + $0x8] sm:$0xff]
      %v211 = vld [vmem:[%s1 + $0x10] sm:$0xff]
      %v212 = vld [vmem:[%s1 + $0x18] sm:$0xff]
      %v213 = vld [vmem:[%s1 + $0x20] sm:$0xff]
      %v214 = vld [vmem:[%s1 + $0x28] sm:$0xff]
      %v215 = vld [vmem:[%s1 + $0x30] sm:$0xff]
      %vm216 = vcmask 457728
      %v218 = vsel %vm216, %v201, 0
      %v221 = vsel %vm216, %v202, 0
      %v224 = vsel %vm216, %v203, 0
      %v227 = vsel %vm216, %v204, 0
      %v230 = vsel %vm216, %v205, 0
      %v233 = vsel %vm216, %v206, 0
      %v236 = vsel %vm216, %v207, 0
      %v239 = vsel %vm216, %v208, 0
      %241 = vmatpush.msra.mxu0 0.0
      %242 = vmatpush.msra.mxu0 0.0
      %243 = vmatpush.msra.mxu0 0.0
      %244 = vmatpush.msra.mxu0 0.0
      %245 = vmatpush.msra.mxu0 0.0
      %246 = vmatpush.msra.mxu0 0.0
      %247 = vmatpush.msra.mxu0 0.0
      %248 = vmatpush.msra.mxu0 0.0
      %249 = vmatpush.msra.mxu0 0.0
      %250 = vmatpush.msra.mxu0 %v215
      %251 = vmatpush.msra.mxu0 %v214
      %252 = vmatpush.msra.mxu0 %v213
      %253 = vmatpush.msra.mxu0 %v212
      %254 = vmatpush.msra.mxu0 %v211
      %255 = vmatpush.msra.mxu0 %v210
      %256 = vmatpush.msra.mxu0 %v209
      %257 = vmatmul.f32.gmra.mxu0 %v218
      %v258 = vpop.f32.mrf.mxu0
      %v259 = vadd.f32 0.0, %v258
      %260 = vmatmul.f32.gmra.mxu0 %v221
      %v261 = vpop.f32.mrf.mxu0
      %v262 = vadd.f32 0.0, %v261
      %263 = vmatmul.f32.gmra.mxu0 %v224
      %v264 = vpop.f32.mrf.mxu0
      %v265 = vadd.f32 0.0, %v264
      %266 = vmatmul.f32.gmra.mxu0 %v227
      %v267 = vpop.f32.mrf.mxu0
      %v268 = vadd.f32 0.0, %v267
      %269 = vmatmul.f32.gmra.mxu0 %v230
      %v270 = vpop.f32.mrf.mxu0
      %v271 = vadd.f32 0.0, %v270
      %272 = vmatmul.f32.gmra.mxu0 %v233
      %v273 = vpop.f32.mrf.mxu0
      %v274 = vadd.f32 0.0, %v273
      %275 = vmatmul.f32.gmra.mxu0 %v236
      %v276 = vpop.f32.mrf.mxu0
      %v277 = vadd.f32 0.0, %v276
      %278 = vmatmul.f32.gmra.mxu0 %v239
      %v279 = vpop.f32.mrf.mxu0
      %v280 = vadd.f32 0.0, %v279
      %281 = vdwg.mxu0
      %v282 = vld [vmem:[%s2] sm:$0x1]
      %v284 = vperm.slane %v282, 0
      %v286 = vmul.f32 %v259, %v284
      %v287 = vmul.f32 %v262, %v284
      %v288 = vmul.f32 %v265, %v284
      %v289 = vmul.f32 %v268, %v284
      %v290 = vmul.f32 %v271, %v284
      %v291 = vmul.f32 %v274, %v284
      %v292 = vmul.f32 %v277, %v284
      %v293 = vmul.f32 %v280, %v284
      %v294 = vld [vmem:[%s3] sm:$0x1]
      %v296 = vperm.slane %v294, 0
      %v298 = vadd.f32 %v286, %v296
      %v299 = vadd.f32 %v287, %v296
      %v300 = vadd.f32 %v288, %v296
      %v301 = vadd.f32 %v289, %v296
      %v302 = vadd.f32 %v290, %v296
      %v303 = vadd.f32 %v291, %v296
      %v304 = vadd.f32 %v292, %v296
      %v305 = vadd.f32 %v293, %v296
      %v306 = vmul.f32 %v298, 0.5
      %v307 = vmul.f32 %v299, 0.5
      %v308 = vmul.f32 %v300, 0.5
      %v309 = vmul.f32 %v301, 0.5
      %v310 = vmul.f32 %v302, 0.5
      %v311 = vmul.f32 %v303, 0.5
      %v312 = vmul.f32 %v304, 0.5
      %v313 = vmul.f32 %v305, 0.5
      %v314 = vmul.f32 %v298, 0.70710677
      %v315 = vmul.f32 %v299, 0.70710677
      %v316 = vmul.f32 %v300, 0.70710677
      %v317 = vmul.f32 %v301, 0.70710677
      %v318 = vmul.f32 %v302, 0.70710677
      %v319 = vmul.f32 %v303, 0.70710677
      %v320 = vmul.f32 %v304, 0.70710677
      %v321 = vmul.f32 %v305, 0.70710677
      %vm322 = vcmp.ge.f32.partialorder %v314, 0.0
      %vm323 = vcmp.ge.f32.partialorder %v315, 0.0
      %vm324 = vcmp.ge.f32.partialorder %v316, 0.0
      %vm325 = vcmp.ge.f32.partialorder %v317, 0.0
      %vm326 = vcmp.ge.f32.partialorder %v318, 0.0
      %vm327 = vcmp.ge.f32.partialorder %v319, 0.0
      %vm328 = vcmp.ge.f32.partialorder %v320, 0.0
      %vm329 = vcmp.ge.f32.partialorder %v321, 0.0
      %v330 = vsel %vm322, 1.0, -1.0
      %v331 = vsel %vm323, 1.0, -1.0
      %v332 = vsel %vm324, 1.0, -1.0
      %v333 = vsel %vm325, 1.0, -1.0
      %v334 = vsel %vm326, 1.0, -1.0
      %v335 = vsel %vm327, 1.0, -1.0
      %v336 = vsel %vm328, 1.0, -1.0
      %v337 = vsel %vm329, 1.0, -1.0
      %v338 = vand.u32 2147483647, %v314
      %v339 = vand.u32 2147483647, %v315
      %v340 = vand.u32 2147483647, %v316
      %v341 = vand.u32 2147483647, %v317
      %v342 = vand.u32 2147483647, %v318
      %v343 = vand.u32 2147483647, %v319
      %v344 = vand.u32 2147483647, %v320
      %v345 = vand.u32 2147483647, %v321
      %v346 = vmul.f32 %v338, 0.3275911
      %v347 = vmul.f32 %v339, 0.3275911
      %v348 = vmul.f32 %v340, 0.3275911
      %v349 = vmul.f32 %v341, 0.3275911
      %v350 = vmul.f32 %v342, 0.3275911
      %v351 = vmul.f32 %v343, 0.3275911
      %v352 = vmul.f32 %v344, 0.3275911
      %v353 = vmul.f32 %v345, 0.3275911
      %v354 = vadd.f32 %v346, 1.0
      %v355 = vadd.f32 %v347, 1.0
      %v356 = vadd.f32 %v348, 1.0
      %v357 = vadd.f32 %v349, 1.0
      %v358 = vadd.f32 %v350, 1.0
      %v359 = vadd.f32 %v351, 1.0
      %v360 = vadd.f32 %v352, 1.0
      %v361 = vadd.f32 %v353, 1.0
      %v362 = vrcp.pop %v354
      %v363 = vmul.f32 %v354, %v362
      %v364 = vsub.f32 1.0, %v363
      %v365 = vmul.f32 %v362, %v364
      %v366 = vadd.f32 %v362, %v365
      %vm367 = vweird.f32 %v354
      %vm368 = vweird.f32 %v362
      %vm369 = vmor %vm367, %vm368
      %v370 = vsel %vm369, %v362, %v366
      %v371 = vand.u32 2147483647, %v354
      %vm372 = vcmp.eq.f32.partialorder %v371, 8.507059e+37
      %v373 = vand.u32 %v354, 2147483648
      %v374 = vor.u32 1.1754944e-38, %v373
      %v375 = vsel %vm372, %v374, %v370
      %v376 = vmul.f32 1.0, %v375
      %v377 = vrcp.pop %v355
      %v378 = vmul.f32 %v355, %v377
      %v379 = vsub.f32 1.0, %v378
      %v380 = vmul.f32 %v377, %v379
      %v381 = vadd.f32 %v377, %v380
      %vm382 = vweird.f32 %v355
      %vm383 = vweird.f32 %v377
      %vm384 = vmor %vm382, %vm383
      %v385 = vsel %vm384, %v377, %v381
      %v386 = vand.u32 2147483647, %v355
      %vm387 = vcmp.eq.f32.partialorder %v386, 8.507059e+37
      %v388 = vand.u32 %v355, 2147483648
      %v389 = vor.u32 1.1754944e-38, %v388
      %v390 = vsel %vm387, %v389, %v385
      %v391 = vmul.f32 1.0, %v390
      %v392 = vrcp.pop %v356
      %v393 = vmul.f32 %v356, %v392
      %v394 = vsub.f32 1.0, %v393
      %v395 = vmul.f32 %v392, %v394
      %v396 = vadd.f32 %v392, %v395
      %vm397 = vweird.f32 %v356
      %vm398 = vweird.f32 %v392
      %vm399 = vmor %vm397, %vm398
      %v400 = vsel %vm399, %v392, %v396
      %v401 = vand.u32 2147483647, %v356
      %vm402 = vcmp.eq.f32.partialorder %v401, 8.507059e+37
      %v403 = vand.u32 %v356, 2147483648
      %v404 = vor.u32 1.1754944e-38, %v403
      %v405 = vsel %vm402, %v404, %v400
      %v406 = vmul.f32 1.0, %v405
      %v407 = vrcp.pop %v357
      %v408 = vmul.f32 %v357, %v407
      %v409 = vsub.f32 1.0, %v408
      %v410 = vmul.f32 %v407, %v409
      %v411 = vadd.f32 %v407, %v410
      %vm412 = vweird.f32 %v357
      %vm413 = vweird.f32 %v407
      %vm414 = vmor %vm412, %vm413
      %v415 = vsel %vm414, %v407, %v411
      %v416 = vand.u32 2147483647, %v357
      %vm417 = vcmp.eq.f32.partialorder %v416, 8.507059e+37
      %v418 = vand.u32 %v357, 2147483648
      %v419 = vor.u32 1.1754944e-38, %v418
      %v420 = vsel %vm417, %v419, %v415
      %v421 = vmul.f32 1.0, %v420
      %v422 = vrcp.pop %v358
      %v423 = vmul.f32 %v358, %v422
      %v424 = vsub.f32 1.0, %v423
      %v425 = vmul.f32 %v422, %v424
      %v426 = vadd.f32 %v422, %v425
      %vm427 = vweird.f32 %v358
      %vm428 = vweird.f32 %v422
      %vm429 = vmor %vm427, %vm428
      %v430 = vsel %vm429, %v422, %v426
      %v431 = vand.u32 2147483647, %v358
      %vm432 = vcmp.eq.f32.partialorder %v431, 8.507059e+37
      %v433 = vand.u32 %v358, 2147483648
      %v434 = vor.u32 1.1754944e-38, %v433
      %v435 = vsel %vm432, %v434, %v430
      %v436 = vmul.f32 1.0, %v435
      %v437 = vrcp.pop %v359
      %v438 = vmul.f32 %v359, %v437
      %v439 = vsub.f32 1.0, %v438
      %v440 = vmul.f32 %v437, %v439
      %v441 = vadd.f32 %v437, %v440
      %vm442 = vweird.f32 %v359
      %vm443 = vweird.f32 %v437
      %vm444 = vmor %vm442, %vm443
      %v445 = vsel %vm444, %v437, %v441
      %v446 = vand.u32 2147483647, %v359
      %vm447 = vcmp.eq.f32.partialorder %v446, 8.507059e+37
      %v448 = vand.u32 %v359, 2147483648
      %v449 = vor.u32 1.1754944e-38, %v448
      %v450 = vsel %vm447, %v449, %v445
      %v451 = vmul.f32 1.0, %v450
      %v452 = vrcp.pop %v360
      %v453 = vmul.f32 %v360, %v452
      %v454 = vsub.f32 1.0, %v453
      %v455 = vmul.f32 %v452, %v454
      %v456 = vadd.f32 %v452, %v455
      %vm457 = vweird.f32 %v360
      %vm458 = vweird.f32 %v452
      %vm459 = vmor %vm457, %vm458
      %v460 = vsel %vm459, %v452, %v456
      %v461 = vand.u32 2147483647, %v360
      %vm462 = vcmp.eq.f32.partialorder %v461, 8.507059e+37
      %v463 = vand.u32 %v360, 2147483648
      %v464 = vor.u32 1.1754944e-38, %v463
      %v465 = vsel %vm462, %v464, %v460
      %v466 = vmul.f32 1.0, %v465
      %v467 = vrcp.pop %v361
      %v468 = vmul.f32 %v361, %v467
      %v469 = vsub.f32 1.0, %v468
      %v470 = vmul.f32 %v467, %v469
      %v471 = vadd.f32 %v467, %v470
      %vm472 = vweird.f32 %v361
      %vm473 = vweird.f32 %v467
      %vm474 = vmor %vm472, %vm473
      %v475 = vsel %vm474, %v467, %v471
      %v476 = vand.u32 2147483647, %v361
      %vm477 = vcmp.eq.f32.partialorder %v476, 8.507059e+37
      %v478 = vand.u32 %v361, 2147483648
      %v479 = vor.u32 1.1754944e-38, %v478
      %v480 = vsel %vm477, %v479, %v475
      %v481 = vmul.f32 1.0, %v480
      %v482 = vmul.f32 %v376, 1.0614054
      %v483 = vmul.f32 %v391, 1.0614054
      %v484 = vmul.f32 %v406, 1.0614054
      %v485 = vmul.f32 %v421, 1.0614054
      %v486 = vmul.f32 %v436, 1.0614054
      %v487 = vmul.f32 %v451, 1.0614054
      %v488 = vmul.f32 %v466, 1.0614054
      %v489 = vmul.f32 %v481, 1.0614054
      %v490 = vadd.f32 %v482, -1.4531521
      %v491 = vadd.f32 %v483, -1.4531521
      %v492 = vadd.f32 %v484, -1.4531521
      %v493 = vadd.f32 %v485, -1.4531521
      %v494 = vadd.f32 %v486, -1.4531521
      %v495 = vadd.f32 %v487, -1.4531521
      %v496 = vadd.f32 %v488, -1.4531521
      %v497 = vadd.f32 %v489, -1.4531521
      %v498 = vmul.f32 %v490, %v376
      %v499 = vmul.f32 %v491, %v391
      %v500 = vmul.f32 %v492, %v406
      %v501 = vmul.f32 %v493, %v421
      %v502 = vmul.f32 %v494, %v436
      %v503 = vmul.f32 %v495, %v451
      %v504 = vmul.f32 %v496, %v466
      %v505 = vmul.f32 %v497, %v481
      %v506 = vadd.f32 %v498, 1.4214138
      %v507 = vadd.f32 %v499, 1.4214138
      %v508 = vadd.f32 %v500, 1.4214138
      %v509 = vadd.f32 %v501, 1.4214138
      %v510 = vadd.f32 %v502, 1.4214138
      %v511 = vadd.f32 %v503, 1.4214138
      %v512 = vadd.f32 %v504, 1.4214138
      %v513 = vadd.f32 %v505, 1.4214138
      %v514 = vmul.f32 %v506, %v376
      %v515 = vmul.f32 %v507, %v391
      %v516 = vmul.f32 %v508, %v406
      %v517 = vmul.f32 %v509, %v421
      %v518 = vmul.f32 %v510, %v436
      %v519 = vmul.f32 %v511, %v451
      %v520 = vmul.f32 %v512, %v466
      %v521 = vmul.f32 %v513, %v481
      %v522 = vadd.f32 %v514, -0.28449672
      %v523 = vadd.f32 %v515, -0.28449672
      %v524 = vadd.f32 %v516, -0.28449672
      %v525 = vadd.f32 %v517, -0.28449672
      %v526 = vadd.f32 %v518, -0.28449672
      %v527 = vadd.f32 %v519, -0.28449672
      %v528 = vadd.f32 %v520, -0.28449672
      %v529 = vadd.f32 %v521, -0.28449672
      %v530 = vmul.f32 %v522, %v376
      %v531 = vmul.f32 %v523, %v391
      %v532 = vmul.f32 %v524, %v406
      %v533 = vmul.f32 %v525, %v421
      %v534 = vmul.f32 %v526, %v436
      %v535 = vmul.f32 %v527, %v451
      %v536 = vmul.f32 %v528, %v466
      %v537 = vmul.f32 %v529, %v481
      %v538 = vadd.f32 %v530, 0.2548296
      %v539 = vadd.f32 %v531, 0.2548296
      %v540 = vadd.f32 %v532, 0.2548296
      %v541 = vadd.f32 %v533, 0.2548296
      %v542 = vadd.f32 %v534, 0.2548296
      %v543 = vadd.f32 %v535, 0.2548296
      %v544 = vadd.f32 %v536, 0.2548296
      %v545 = vadd.f32 %v537, 0.2548296
      %v546 = vmul.f32 %v538, %v376
      %v547 = vmul.f32 %v539, %v391
      %v548 = vmul.f32 %v540, %v406
      %v549 = vmul.f32 %v541, %v421
      %v550 = vmul.f32 %v542, %v436
      %v551 = vmul.f32 %v543, %v451
      %v552 = vmul.f32 %v544, %v466
      %v553 = vmul.f32 %v545, %v481
      %v554 = vsub.f32 0.0, %v338
      %v555 = vsub.f32 0.0, %v339
      %v556 = vsub.f32 0.0, %v340
      %v557 = vsub.f32 0.0, %v341
      %v558 = vsub.f32 0.0, %v342
      %v559 = vsub.f32 0.0, %v343
      %v560 = vsub.f32 0.0, %v344
      %v561 = vsub.f32 0.0, %v345
      %v562 = vmul.f32 %v554, %v338
      %v563 = vmul.f32 %v555, %v339
      %v564 = vmul.f32 %v556, %v340
      %v565 = vmul.f32 %v557, %v341
      %v566 = vmul.f32 %v558, %v342
      %v567 = vmul.f32 %v559, %v343
      %v568 = vmul.f32 %v560, %v344
      %v569 = vmul.f32 %v561, %v345
      %v570 = vmul.f32 %v562, 1.442695
      %v571 = vpow.pop %v570
      %v572 = vmul.f32 %v563, 1.442695
      %v573 = vpow.pop %v572
      %v574 = vmul.f32 %v564, 1.442695
      %v575 = vpow.pop %v574
      %v576 = vmul.f32 %v565, 1.442695
      %v577 = vpow.pop %v576
      %v578 = vmul.f32 %v566, 1.442695
      %v579 = vpow.pop %v578
      %v580 = vmul.f32 %v567, 1.442695
      %v581 = vpow.pop %v580
      %v582 = vmul.f32 %v568, 1.442695
      %v583 = vpow.pop %v582
      %v584 = vmul.f32 %v569, 1.442695
      %v585 = vpow.pop %v584
      %v586 = vmul.f32 %v546, %v571
      %v587 = vmul.f32 %v547, %v573
      %v588 = vmul.f32 %v548, %v575
      %v589 = vmul.f32 %v549, %v577
      %v590 = vmul.f32 %v550, %v579
      %v591 = vmul.f32 %v551, %v581
      %v592 = vmul.f32 %v552, %v583
      %v593 = vmul.f32 %v553, %v585
      %v594 = vsub.f32 1.0, %v586
      %v595 = vsub.f32 1.0, %v587
      %v596 = vsub.f32 1.0, %v588
      %v597 = vsub.f32 1.0, %v589
      %v598 = vsub.f32 1.0, %v590
      %v599 = vsub.f32 1.0, %v591
      %v600 = vsub.f32 1.0, %v592
      %v601 = vsub.f32 1.0, %v593
      %v602 = vmul.f32 %v330, %v594
      %v603 = vmul.f32 %v331, %v595
      %v604 = vmul.f32 %v332, %v596
      %v605 = vmul.f32 %v333, %v597
      %v606 = vmul.f32 %v334, %v598
      %v607 = vmul.f32 %v335, %v599
      %v608 = vmul.f32 %v336, %v600
      %v609 = vmul.f32 %v337, %v601
      %v610 = vadd.f32 %v602, 1.0
      %v611 = vadd.f32 %v603, 1.0
      %v612 = vadd.f32 %v604, 1.0
      %v613 = vadd.f32 %v605, 1.0
      %v614 = vadd.f32 %v606, 1.0
      %v615 = vadd.f32 %v607, 1.0
      %v616 = vadd.f32 %v608, 1.0
      %v617 = vadd.f32 %v609, 1.0
      %v618 = vmul.f32 %v306, %v610
      %v619 = vmul.f32 %v307, %v611
      %v620 = vmul.f32 %v308, %v612
      %v621 = vmul.f32 %v309, %v613
      %v622 = vmul.f32 %v310, %v614
      %v623 = vmul.f32 %v311, %v615
      %v624 = vmul.f32 %v312, %v616
      %v625 = vmul.f32 %v313, %v617
      %vm626 = vcmask 523264
      %627 = vst.msk [vmem:[%s199] sm:$0xff] %vm626, %v618
      %628 = vst.msk [vmem:[%s199 + $0x8] sm:$0xff] %vm626, %v619
      %629 = vst.msk [vmem:[%s199 + $0x10] sm:$0xff] %vm626, %v620
      %630 = vst.msk [vmem:[%s199 + $0x18] sm:$0xff] %vm626, %v621
      %631 = vst.msk [vmem:[%s199 + $0x20] sm:$0xff] %vm626, %v622
      %632 = vst.msk [vmem:[%s199 + $0x28] sm:$0xff] %vm626, %v623
      %633 = vst.msk [vmem:[%s199 + $0x30] sm:$0xff] %vm626, %v624
      %634 = vst.msk [vmem:[%s199 + $0x38] sm:$0xff] %vm626, %v625
      %s635 = smul.u32 8, %s15
      %p636 = scmp.lt.s32.totalorder %s635, 15
      %s637 = scalar_select %p636, %s635, 15
      %s638 = smul.addr %s637, 8
      %s639 = scalar_lea.vmem %s4, %s638
      // Predicated region
      $region37: #{branch_forward_pallas.3} parent=35 // pred_check
        %p640 = pneg %p122
      $region38: #{branch_forward_pallas.3} parent=35 // pred_check_branch
        %642 = sbr.rel (%p640) target = $region40
      $region39: #{branch_forward_pallas.3} parent=35 // pred_region
        %s643 = smul.u32 8, %s15
      $region40: #{branch_forward_pallas.3} parent=35 // pred_fallthru
        _
    $region36: #{branch_forward_pallas.3} parent=5 // pred_fallthru
      _
    %p644 = scmp.le.s32.totalorder 2, %s10
    // Predicated region
    $region41: #{branch_forward_pallas.3} parent=5 // pred_check
      %p645 = pneg %p644
    $region42: #{branch_forward_pallas.3} parent=5 // pred_check_branch
      %647 = sbr.rel (%p645) target = $region44
    $region43: #{branch_forward_pallas.3} parent=5 // pred_region
      %s648 = ssub.s32 %s10, 2
      // Predicated region
      $region45: #{branch_forward_pallas.3} parent=43 // pred_check
        %p649 = pneg %p128
      $region46: #{branch_forward_pallas.3} parent=43 // pred_check_branch
        %651 = sbr.rel (%p649) target = $region48
      $region47: #{branch_forward_pallas.3} parent=43 // pred_region
        %s652 = smul.u32 8, %s16
        %p653 = scmp.lt.s32.totalorder %s652, 15
        %s654 = scalar_select %p653, %s652, 15
        %s655 = smul.addr %s654, 8
        %s656 = scalar_lea.vmem %s4, %s655
      $region48: #{branch_forward_pallas.3} parent=43 // pred_fallthru
        _
    $region44: #{branch_forward_pallas.3} parent=5 // pred_fallthru
      _
  $region6: #{branch_forward_pallas.3} parent=0 // loop_footer
    %s14 = sadd.s32 1, %s10
  $region7: #{branch_forward_pallas.3} parent=0 // loop_footer_branch
    %9 = sbr.rel target = $region3
  $region8: #{branch_forward_pallas.3} parent=0 // loop_exit
    _

// kernel: branch_forward_pallas.5
$region0: #{branch_forward_pallas.5}
  #allocation0 [shape = 'u32[]', space=smem, size = 0x4, offset = 0x4, fixed_abs, tag = 'smem constant byte address 0x4 - core index']
  #allocation1 [shape = 'u32[72,128]{1,0:T(1,128)}', space=vmem, size = 0x9000, scoped, tag = 'internal scratch']
  %s0 = inlined_call_operand.vmem [shape: f32[8,1152], index: 0, kind: input, shape index: {}]
  %s1 = inlined_call_operand.vmem [shape: f32[1152,256], index: 1, kind: input, shape index: {}]
  %s2 = inlined_call_operand.vmem [shape: f32[1,256], index: 2, kind: input, shape index: {}]
  %s3 = inlined_call_operand.vmem [shape: f32[1,256], index: 3, kind: input, shape index: {}]
  %s4 = inlined_call_operand.vmem [shape: f32[8,256], index: 4, kind: output, shape index: {}]
  %s5 = sld [smem:[#allocation0]]
  $region26: #{branch_forward_pallas.5} parent=0
    _
  %s7 = ssub.s32 1, %s5
  %s8 = scalar_select 0, %s7, %s5
  // Predicated region
  $region2: #{branch_forward_pallas.5} parent=0 // pred_check
    _
  $region3: #{branch_forward_pallas.5} parent=0 // pred_check_branch
    %10 = sbr.rel (0) target = $region5
  $region4: #{branch_forward_pallas.5} parent=0 // pred_region
    _
  $region5: #{branch_forward_pallas.5} parent=0 // pred_fallthru
    _
  // Predicated region
  $region6: #{branch_forward_pallas.5} parent=0 // pred_check
    _
  $region7: #{branch_forward_pallas.5} parent=0 // pred_check_branch
    %12 = sbr.rel (0) target = $region9
  $region8: #{branch_forward_pallas.5} parent=0 // pred_region
    _
  $region9: #{branch_forward_pallas.5} parent=0 // pred_fallthru
    _
  // Predicated region
  $region10: #{branch_forward_pallas.5} parent=0 // pred_check
    _
  $region11: #{branch_forward_pallas.5} parent=0 // pred_check_branch
    %14 = sbr.rel (0) target = $region13
  $region12: #{branch_forward_pallas.5} parent=0 // pred_region
    _
  $region13: #{branch_forward_pallas.5} parent=0 // pred_fallthru
    _
  // Predicated region
  $region14: #{branch_forward_pallas.5} parent=0 // pred_check
    _
  $region15: #{branch_forward_pallas.5} parent=0 // pred_check_branch
    %16 = sbr.rel (0) target = $region17
  $region16: #{branch_forward_pallas.5} parent=0 // pred_region
    _
  $region17: #{branch_forward_pallas.5} parent=0 // pred_fallthru
    _
  %v17 = vld [vmem:[%s0] sm:$0xff]
  %v18 = vld [vmem:[%s0 + $0x8] sm:$0xff]
  %v19 = vld [vmem:[%s0 + $0x10] sm:$0xff]
  %v20 = vld [vmem:[%s0 + $0x18] sm:$0xff]
  %v21 = vld [vmem:[%s0 + $0x20] sm:$0xff]
  %v22 = vld [vmem:[%s0 + $0x28] sm:$0xff]
  %v23 = vld [vmem:[%s0 + $0x30] sm:$0xff]
  %v24 = vld [vmem:[%s0 + $0x38] sm:$0xff]
  %v25 = vld [vmem:[%s0 + $0x40] sm:$0xff]
  %v26 = vld [vmem:[%s1] sm:$0xff]
  %v27 = vld [vmem:[%s1 + $0x8] sm:$0xff]
  %v28 = vld [vmem:[%s1 + $0x10] sm:$0xff]
  %v29 = vld [vmem:[%s1 + $0x18] sm:$0xff]
  %v30 = vld [vmem:[%s1 + $0x20] sm:$0xff]
  %v31 = vld [vmem:[%s1 + $0x28] sm:$0xff]
  %v32 = vld [vmem:[%s1 + $0x30] sm:$0xff]
  %v33 = vld [vmem:[%s1 + $0x38] sm:$0xff]
  %v34 = vld [vmem:[%s1 + $0x40] sm:$0xff]
  %v35 = vld [vmem:[%s1 + $0x48] sm:$0xff]
  %v36 = vld [vmem:[%s1 + $0x50] sm:$0xff]
  %v37 = vld [vmem:[%s1 + $0x58] sm:$0xff]
  %v38 = vld [vmem:[%s1 + $0x60] sm:$0xff]
  %v39 = vld [vmem:[%s1 + $0x68] sm:$0xff]
  %v40 = vld [vmem:[%s1 + $0x70] sm:$0xff]
  %v41 = vld [vmem:[%s1 + $0x78] sm:$0xff]
  %v42 = vld [vmem:[%s1 + $0x80] sm:$0xff]
  %v43 = vld [vmem:[%s1 + $0x88] sm:$0xff]
  %v44 = vld [vmem:[%s1 + $0x90] sm:$0xff]
  %v45 = vld [vmem:[%s1 + $0x98] sm:$0xff]
  %v46 = vld [vmem:[%s1 + $0xa0] sm:$0xff]
  %v47 = vld [vmem:[%s1 + $0xa8] sm:$0xff]
  %v48 = vld [vmem:[%s1 + $0xb0] sm:$0xff]
  %v49 = vld [vmem:[%s1 + $0xb8] sm:$0xff]
  %v50 = vld [vmem:[%s1 + $0xc0] sm:$0xff]
  %v51 = vld [vmem:[%s1 + $0xc8] sm:$0xff]
  %v52 = vld [vmem:[%s1 + $0xd0] sm:$0xff]
  %v53 = vld [vmem:[%s1 + $0xd8] sm:$0xff]
  %v54 = vld [vmem:[%s1 + $0xe0] sm:$0xff]
  %v55 = vld [vmem:[%s1 + $0xe8] sm:$0xff]
  %v56 = vld [vmem:[%s1 + $0xf0] sm:$0xff]
  %v57 = vld [vmem:[%s1 + $0xf8] sm:$0xff]
  %v58 = vld [vmem:[%s1 + $0x100] sm:$0xff]
  %v59 = vld [vmem:[%s1 + $0x108] sm:$0xff]
  %v60 = vld [vmem:[%s1 + $0x110] sm:$0xff]
  %v61 = vld [vmem:[%s1 + $0x118] sm:$0xff]
  %v62 = vld [vmem:[%s1 + $0x120] sm:$0xff]
  %v63 = vld [vmem:[%s1 + $0x128] sm:$0xff]
  %v64 = vld [vmem:[%s1 + $0x130] sm:$0xff]
  %v65 = vld [vmem:[%s1 + $0x138] sm:$0xff]
  %v66 = vld [vmem:[%s1 + $0x140] sm:$0xff]
  %v67 = vld [vmem:[%s1 + $0x148] sm:$0xff]
  %v68 = vld [vmem:[%s1 + $0x150] sm:$0xff]
  %v69 = vld [vmem:[%s1 + $0x158] sm:$0xff]
  %v70 = vld [vmem:[%s1 + $0x160] sm:$0xff]
  %v71 = vld [vmem:[%s1 + $0x168] sm:$0xff]
  %v72 = vld [vmem:[%s1 + $0x170] sm:$0xff]
  %v73 = vld [vmem:[%s1 + $0x178] sm:$0xff]
  %v74 = vld [vmem:[%s1 + $0x180] sm:$0xff]
  %v75 = vld [vmem:[%s1 + $0x188] sm:$0xff]
  %v76 = vld [vmem:[%s1 + $0x190] sm:$0xff]
  %v77 = vld [vmem:[%s1 + $0x198] sm:$0xff]
  %v78 = vld [vmem:[%s1 + $0x1a0] sm:$0xff]
  %v79 = vld [vmem:[%s1 + $0x1a8] sm:$0xff]
  %v80 = vld [vmem:[%s1 + $0x1b0] sm:$0xff]
  %v81 = vld [vmem:[%s1 + $0x1b8] sm:$0xff]
  %v82 = vld [vmem:[%s1 + $0x1c0] sm:$0xff]
  %v83 = vld [vmem:[%s1 + $0x1c8] sm:$0xff]
  %v84 = vld [vmem:[%s1 + $0x1d0] sm:$0xff]
  %v85 = vld [vmem:[%s1 + $0x1d8] sm:$0xff]
  %v86 = vld [vmem:[%s1 + $0x1e0] sm:$0xff]
  %v87 = vld [vmem:[%s1 + $0x1e8] sm:$0xff]
  %v88 = vld [vmem:[%s1 + $0x1f0] sm:$0xff]
  %v89 = vld [vmem:[%s1 + $0x1f8] sm:$0xff]
  %v90 = vld [vmem:[%s1 + $0x200] sm:$0xff]
  %v91 = vld [vmem:[%s1 + $0x208] sm:$0xff]
  %v92 = vld [vmem:[%s1 + $0x210] sm:$0xff]
  %v93 = vld [vmem:[%s1 + $0x218] sm:$0xff]
  %v94 = vld [vmem:[%s1 + $0x220] sm:$0xff]
  %v95 = vld [vmem:[%s1 + $0x228] sm:$0xff]
  %v96 = vld [vmem:[%s1 + $0x230] sm:$0xff]
  %v97 = vld [vmem:[%s1 + $0x238] sm:$0xff]
  %v98 = vld [vmem:[%s1 + $0x240] sm:$0xff]
  %v99 = vld [vmem:[%s1 + $0x248] sm:$0xff]
  %v100 = vld [vmem:[%s1 + $0x250] sm:$0xff]
  %v101 = vld [vmem:[%s1 + $0x258] sm:$0xff]
  %v102 = vld [vmem:[%s1 + $0x260] sm:$0xff]
  %v103 = vld [vmem:[%s1 + $0x268] sm:$0xff]
  %v104 = vld [vmem:[%s1 + $0x270] sm:$0xff]
  %v105 = vld [vmem:[%s1 + $0x278] sm:$0xff]
  %v106 = vld [vmem:[%s1 + $0x280] sm:$0xff]
  %v107 = vld [vmem:[%s1 + $0x288] sm:$0xff]
  %v108 = vld [vmem:[%s1 + $0x290] sm:$0xff]
  %v109 = vld [vmem:[%s1 + $0x298] sm:$0xff]
  %v110 = vld [vmem:[%s1 + $0x2a0] sm:$0xff]
  %v111 = vld [vmem:[%s1 + $0x2a8] sm:$0xff]
  %v112 = vld [vmem:[%s1 + $0x2b0] sm:$0xff]
  %v113 = vld [vmem:[%s1 + $0x2b8] sm:$0xff]
  %v114 = vld [vmem:[%s1 + $0x2c0] sm:$0xff]
  %v115 = vld [vmem:[%s1 + $0x2c8] sm:$0xff]
  %v116 = vld [vmem:[%s1 + $0x2d0] sm:$0xff]
  %v117 = vld [vmem:[%s1 + $0x2d8] sm:$0xff]
  %v118 = vld [vmem:[%s1 + $0x2e0] sm:$0xff]
  %v119 = vld [vmem:[%s1 + $0x2e8] sm:$0xff]
  %v120 = vld [vmem:[%s1 + $0x2f0] sm:$0xff]
  %v121 = vld [vmem:[%s1 + $0x2f8] sm:$0xff]
  %v122 = vld [vmem:[%s1 + $0x300] sm:$0xff]
  %v123 = vld [vmem:[%s1 + $0x308] sm:$0xff]
  %v124 = vld [vmem:[%s1 + $0x310] sm:$0xff]
  %v125 = vld [vmem:[%s1 + $0x318] sm:$0xff]
  %v126 = vld [vmem:[%s1 + $0x320] sm:$0xff]
  %v127 = vld [vmem:[%s1 + $0x328] sm:$0xff]
  %v128 = vld [vmem:[%s1 + $0x330] sm:$0xff]
  %v129 = vld [vmem:[%s1 + $0x338] sm:$0xff]
  %v130 = vld [vmem:[%s1 + $0x340] sm:$0xff]
  %v131 = vld [vmem:[%s1 + $0x348] sm:$0xff]
  %v132 = vld [vmem:[%s1 + $0x350] sm:$0xff]
  %v133 = vld [vmem:[%s1 + $0x358] sm:$0xff]
  %v134 = vld [vmem:[%s1 + $0x360] sm:$0xff]
  %v135 = vld [vmem:[%s1 + $0x368] sm:$0xff]
  %v136 = vld [vmem:[%s1 + $0x370] sm:$0xff]
  %v137 = vld [vmem:[%s1 + $0x378] sm:$0xff]
  %v138 = vld [vmem:[%s1 + $0x380] sm:$0xff]
  %v139 = vld [vmem:[%s1 + $0x388] sm:$0xff]
  %v140 = vld [vmem:[%s1 + $0x390] sm:$0xff]
  %v141 = vld [vmem:[%s1 + $0x398] sm:$0xff]
  %v142 = vld [vmem:[%s1 + $0x3a0] sm:$0xff]
  %v143 = vld [vmem:[%s1 + $0x3a8] sm:$0xff]
  %v144 = vld [vmem:[%s1 + $0x3b0] sm:$0xff]
  %v145 = vld [vmem:[%s1 + $0x3b8] sm:$0xff]
  %v146 = vld [vmem:[%s1 + $0x3c0] sm:$0xff]
  %v147 = vld [vmem:[%s1 + $0x3c8] sm:$0xff]
  %v148 = vld [vmem:[%s1 + $0x3d0] sm:$0xff]
  %v149 = vld [vmem:[%s1 + $0x3d8] sm:$0xff]
  %v150 = vld [vmem:[%s1 + $0x3e0] sm:$0xff]
  %v151 = vld [vmem:[%s1 + $0x3e8] sm:$0xff]
  %v152 = vld [vmem:[%s1 + $0x3f0] sm:$0xff]
  %v153 = vld [vmem:[%s1 + $0x3f8] sm:$0xff]
  %v154 = vld [vmem:[%s1 + $0x400] sm:$0xff]
  %v155 = vld [vmem:[%s1 + $0x408] sm:$0xff]
  %v156 = vld [vmem:[%s1 + $0x410] sm:$0xff]
  %v157 = vld [vmem:[%s1 + $0x418] sm:$0xff]
  %v158 = vld [vmem:[%s1 + $0x420] sm:$0xff]
  %v159 = vld [vmem:[%s1 + $0x428] sm:$0xff]
  %v160 = vld [vmem:[%s1 + $0x430] sm:$0xff]
  %v161 = vld [vmem:[%s1 + $0x438] sm:$0xff]
  %v162 = vld [vmem:[%s1 + $0x440] sm:$0xff]
  %v163 = vld [vmem:[%s1 + $0x448] sm:$0xff]
  %v164 = vld [vmem:[%s1 + $0x450] sm:$0xff]
  %v165 = vld [vmem:[%s1 + $0x458] sm:$0xff]
  %v166 = vld [vmem:[%s1 + $0x460] sm:$0xff]
  %v167 = vld [vmem:[%s1 + $0x468] sm:$0xff]
  %v168 = vld [vmem:[%s1 + $0x470] sm:$0xff]
  %v169 = vld [vmem:[%s1 + $0x478] sm:$0xff]
  %v170 = vld [vmem:[%s1 + $0x480] sm:$0xff]
  %v171 = vld [vmem:[%s1 + $0x488] sm:$0xff]
  %v172 = vld [vmem:[%s1 + $0x490] sm:$0xff]
  %v173 = vld [vmem:[%s1 + $0x498] sm:$0xff]
  %v174 = vld [vmem:[%s1 + $0x4a0] sm:$0xff]
  %v175 = vld [vmem:[%s1 + $0x4a8] sm:$0xff]
  %v176 = vld [vmem:[%s1 + $0x4b0] sm:$0xff]
  %v177 = vld [vmem:[%s1 + $0x4b8] sm:$0xff]
  %v178 = vld [vmem:[%s1 + $0x4c0] sm:$0xff]
  %v179 = vld [vmem:[%s1 + $0x4c8] sm:$0xff]
  %v180 = vld [vmem:[%s1 + $0x4d0] sm:$0xff]
  %v181 = vld [vmem:[%s1 + $0x4d8] sm:$0xff]
  %v182 = vld [vmem:[%s1 + $0x4e0] sm:$0xff]
  %v183 = vld [vmem:[%s1 + $0x4e8] sm:$0xff]
  %v184 = vld [vmem:[%s1 + $0x4f0] sm:$0xff]
  %v185 = vld [vmem:[%s1 + $0x4f8] sm:$0xff]
  %v186 = vld [vmem:[%s1 + $0x500] sm:$0xff]
  %v187 = vld [vmem:[%s1 + $0x508] sm:$0xff]
  %v188 = vld [vmem:[%s1 + $0x510] sm:$0xff]
  %v189 = vld [vmem:[%s1 + $0x518] sm:$0xff]
  %v190 = vld [vmem:[%s1 + $0x520] sm:$0xff]
  %v191 = vld [vmem:[%s1 + $0x528] sm:$0xff]
  %v192 = vld [vmem:[%s1 + $0x530] sm:$0xff]
  %v193 = vld [vmem:[%s1 + $0x538] sm:$0xff]
  %v194 = vld [vmem:[%s1 + $0x540] sm:$0xff]
  %v195 = vld [vmem:[%s1 + $0x548] sm:$0xff]
  %v196 = vld [vmem:[%s1 + $0x550] sm:$0xff]
  %v197 = vld [vmem:[%s1 + $0x558] sm:$0xff]
  %v198 = vld [vmem:[%s1 + $0x560] sm:$0xff]
  %v199 = vld [vmem:[%s1 + $0x568] sm:$0xff]
  %v200 = vld [vmem:[%s1 + $0x570] sm:$0xff]
  %v201 = vld [vmem:[%s1 + $0x578] sm:$0xff]
  %v202 = vld [vmem:[%s1 + $0x580] sm:$0xff]
  %v203 = vld [vmem:[%s1 + $0x588] sm:$0xff]
  %v204 = vld [vmem:[%s1 + $0x590] sm:$0xff]
  %v205 = vld [vmem:[%s1 + $0x598] sm:$0xff]
  %v206 = vld [vmem:[%s1 + $0x5a0] sm:$0xff]
  %v207 = vld [vmem:[%s1 + $0x5a8] sm:$0xff]
  %v208 = vld [vmem:[%s1 + $0x5b0] sm:$0xff]
  %v209 = vld [vmem:[%s1 + $0x5b8] sm:$0xff]
  %v210 = vld [vmem:[%s1 + $0x5c0] sm:$0xff]
  %v211 = vld [vmem:[%s1 + $0x5c8] sm:$0xff]
  %v212 = vld [vmem:[%s1 + $0x5d0] sm:$0xff]
  %v213 = vld [vmem:[%s1 + $0x5d8] sm:$0xff]
  %v214 = vld [vmem:[%s1 + $0x5e0] sm:$0xff]
  %v215 = vld [vmem:[%s1 + $0x5e8] sm:$0xff]
  %v216 = vld [vmem:[%s1 + $0x5f0] sm:$0xff]
  %v217 = vld [vmem:[%s1 + $0x5f8] sm:$0xff]
  %v218 = vld [vmem:[%s1 + $0x600] sm:$0xff]
  %v219 = vld [vmem:[%s1 + $0x608] sm:$0xff]
  %v220 = vld [vmem:[%s1 + $0x610] sm:$0xff]
  %v221 = vld [vmem:[%s1 + $0x618] sm:$0xff]
  %v222 = vld [vmem:[%s1 + $0x620] sm:$0xff]
  %v223 = vld [vmem:[%s1 + $0x628] sm:$0xff]
  %v224 = vld [vmem:[%s1 + $0x630] sm:$0xff]
  %v225 = vld [vmem:[%s1 + $0x638] sm:$0xff]
  %v226 = vld [vmem:[%s1 + $0x640] sm:$0xff]
  %v227 = vld [vmem:[%s1 + $0x648] sm:$0xff]
  %v228 = vld [vmem:[%s1 + $0x650] sm:$0xff]
  %v229 = vld [vmem:[%s1 + $0x658] sm:$0xff]
  %v230 = vld [vmem:[%s1 + $0x660] sm:$0xff]
  %v231 = vld [vmem:[%s1 + $0x668] sm:$0xff]
  %v232 = vld [vmem:[%s1 + $0x670] sm:$0xff]
  %v233 = vld [vmem:[%s1 + $0x678] sm:$0xff]
  %v234 = vld [vmem:[%s1 + $0x680] sm:$0xff]
  %v235 = vld [vmem:[%s1 + $0x688] sm:$0xff]
  %v236 = vld [vmem:[%s1 + $0x690] sm:$0xff]
  %v237 = vld [vmem:[%s1 + $0x698] sm:$0xff]
  %v238 = vld [vmem:[%s1 + $0x6a0] sm:$0xff]
  %v239 = vld [vmem:[%s1 + $0x6a8] sm:$0xff]
  %v240 = vld [vmem:[%s1 + $0x6b0] sm:$0xff]
  %v241 = vld [vmem:[%s1 + $0x6b8] sm:$0xff]
  %v242 = vld [vmem:[%s1 + $0x6c0] sm:$0xff]
  %v243 = vld [vmem:[%s1 + $0x6c8] sm:$0xff]
  %v244 = vld [vmem:[%s1 + $0x6d0] sm:$0xff]
  %v245 = vld [vmem:[%s1 + $0x6d8] sm:$0xff]
  %v246 = vld [vmem:[%s1 + $0x6e0] sm:$0xff]
  %v247 = vld [vmem:[%s1 + $0x6e8] sm:$0xff]
  %v248 = vld [vmem:[%s1 + $0x6f0] sm:$0xff]
  %v249 = vld [vmem:[%s1 + $0x6f8] sm:$0xff]
  %v250 = vld [vmem:[%s1 + $0x700] sm:$0xff]
  %v251 = vld [vmem:[%s1 + $0x708] sm:$0xff]
  %v252 = vld [vmem:[%s1 + $0x710] sm:$0xff]
  %v253 = vld [vmem:[%s1 + $0x718] sm:$0xff]
  %v254 = vld [vmem:[%s1 + $0x720] sm:$0xff]
  %v255 = vld [vmem:[%s1 + $0x728] sm:$0xff]
  %v256 = vld [vmem:[%s1 + $0x730] sm:$0xff]
  %v257 = vld [vmem:[%s1 + $0x738] sm:$0xff]
  %v258 = vld [vmem:[%s1 + $0x740] sm:$0xff]
  %v259 = vld [vmem:[%s1 + $0x748] sm:$0xff]
  %v260 = vld [vmem:[%s1 + $0x750] sm:$0xff]
  %v261 = vld [vmem:[%s1 + $0x758] sm:$0xff]
  %v262 = vld [vmem:[%s1 + $0x760] sm:$0xff]
  %v263 = vld [vmem:[%s1 + $0x768] sm:$0xff]
  %v264 = vld [vmem:[%s1 + $0x770] sm:$0xff]
  %v265 = vld [vmem:[%s1 + $0x778] sm:$0xff]
  %v266 = vld [vmem:[%s1 + $0x780] sm:$0xff]
  %v267 = vld [vmem:[%s1 + $0x788] sm:$0xff]
  %v268 = vld [vmem:[%s1 + $0x790] sm:$0xff]
  %v269 = vld [vmem:[%s1 + $0x798] sm:$0xff]
  %v270 = vld [vmem:[%s1 + $0x7a0] sm:$0xff]
  %v271 = vld [vmem:[%s1 + $0x7a8] sm:$0xff]
  %v272 = vld [vmem:[%s1 + $0x7b0] sm:$0xff]
  %v273 = vld [vmem:[%s1 + $0x7b8] sm:$0xff]
  %v274 = vld [vmem:[%s1 + $0x7c0] sm:$0xff]
  %v275 = vld [vmem:[%s1 + $0x7c8] sm:$0xff]
  %v276 = vld [vmem:[%s1 + $0x7d0] sm:$0xff]
  %v277 = vld [vmem:[%s1 + $0x7d8] sm:$0xff]
  %v278 = vld [vmem:[%s1 + $0x7e0] sm:$0xff]
  %v279 = vld [vmem:[%s1 + $0x7e8] sm:$0xff]
  %v280 = vld [vmem:[%s1 + $0x7f0] sm:$0xff]
  %v281 = vld [vmem:[%s1 + $0x7f8] sm:$0xff]
  %v282 = vld [vmem:[%s1 + $0x800] sm:$0xff]
  %v283 = vld [vmem:[%s1 + $0x808] sm:$0xff]
  %v284 = vld [vmem:[%s1 + $0x810] sm:$0xff]
  %v285 = vld [vmem:[%s1 + $0x818] sm:$0xff]
  %v286 = vld [vmem:[%s1 + $0x820] sm:$0xff]
  %v287 = vld [vmem:[%s1 + $0x828] sm:$0xff]
  %v288 = vld [vmem:[%s1 + $0x830] sm:$0xff]
  %v289 = vld [vmem:[%s1 + $0x838] sm:$0xff]
  %v290 = vld [vmem:[%s1 + $0x840] sm:$0xff]
  %v291 = vld [vmem:[%s1 + $0x848] sm:$0xff]
  %v292 = vld [vmem:[%s1 + $0x850] sm:$0xff]
  %v293 = vld [vmem:[%s1 + $0x858] sm:$0xff]
  %v294 = vld [vmem:[%s1 + $0x860] sm:$0xff]
  %v295 = vld [vmem:[%s1 + $0x868] sm:$0xff]
  %v296 = vld [vmem:[%s1 + $0x870] sm:$0xff]
  %v297 = vld [vmem:[%s1 + $0x878] sm:$0xff]
  %v298 = vld [vmem:[%s1 + $0x880] sm:$0xff]
  %v299 = vld [vmem:[%s1 + $0x888] sm:$0xff]
  %v300 = vld [vmem:[%s1 + $0x890] sm:$0xff]
  %v301 = vld [vmem:[%s1 + $0x898] sm:$0xff]
  %v302 = vld [vmem:[%s1 + $0x8a0] sm:$0xff]
  %v303 = vld [vmem:[%s1 + $0x8a8] sm:$0xff]
  %v304 = vld [vmem:[%s1 + $0x8b0] sm:$0xff]
  %v305 = vld [vmem:[%s1 + $0x8b8] sm:$0xff]
  %v306 = vld [vmem:[%s1 + $0x8c0] sm:$0xff]
  %v307 = vld [vmem:[%s1 + $0x8c8] sm:$0xff]
  %v308 = vld [vmem:[%s1 + $0x8d0] sm:$0xff]
  %v309 = vld [vmem:[%s1 + $0x8d8] sm:$0xff]
  %v310 = vld [vmem:[%s1 + $0x8e0] sm:$0xff]
  %v311 = vld [vmem:[%s1 + $0x8e8] sm:$0xff]
  %v312 = vld [vmem:[%s1 + $0x8f0] sm:$0xff]
  %v313 = vld [vmem:[%s1 + $0x8f8] sm:$0xff]
  %314 = vmatpush.msra.mxu0 %v56
  %315 = vmatpush.msra.mxu0 %v54
  %316 = vmatpush.msra.mxu0 %v52
  %317 = vmatpush.msra.mxu0 %v50
  %318 = vmatpush.msra.mxu0 %v48
  %319 = vmatpush.msra.mxu0 %v46
  %320 = vmatpush.msra.mxu0 %v44
  %321 = vmatpush.msra.mxu0 %v42
  %322 = vmatpush.msra.mxu0 %v40
  %323 = vmatpush.msra.mxu0 %v38
  %324 = vmatpush.msra.mxu0 %v36
  %325 = vmatpush.msra.mxu0 %v34
  %326 = vmatpush.msra.mxu0 %v32
  %327 = vmatpush.msra.mxu0 %v30
  %328 = vmatpush.msra.mxu0 %v28
  %329 = vmatpush.msra.mxu0 %v26
  %330 = vmatmul.f32.gmra.mxu0 %v17
  %v331 = vpop.f32.mrf.mxu0
  %v332 = vadd.f32 0.0, %v331
  %333 = vdwg.mxu0
  %334 = vmatpush.msra.mxu0 %v88
  %335 = vmatpush.msra.mxu0 %v86
  %336 = vmatpush.msra.mxu0 %v84
  %337 = vmatpush.msra.mxu0 %v82
  %338 = vmatpush.msra.mxu0 %v80
  %339 = vmatpush.msra.mxu0 %v78
  %340 = vmatpush.msra.mxu0 %v76
  %341 = vmatpush.msra.mxu0 %v74
  %342 = vmatpush.msra.mxu0 %v72
  %343 = vmatpush.msra.mxu0 %v70
  %344 = vmatpush.msra.mxu0 %v68
  %345 = vmatpush.msra.mxu0 %v66
  %346 = vmatpush.msra.mxu0 %v64
  %347 = vmatpush.msra.mxu0 %v62
  %348 = vmatpush.msra.mxu0 %v60
  %349 = vmatpush.msra.mxu0 %v58
  %350 = vmatmul.f32.gmra.mxu0 %v18
  %v351 = vpop.f32.mrf.mxu0
  %v352 = vadd.f32 %v332, %v351
  %353 = vdwg.mxu0
  %354 = vmatpush.msra.mxu0 %v120
  %355 = vmatpush.msra.mxu0 %v118
  %356 = vmatpush.msra.mxu0 %v116
  %357 = vmatpush.msra.mxu0 %v114
  %358 = vmatpush.msra.mxu0 %v112
  %359 = vmatpush.msra.mxu0 %v110
  %360 = vmatpush.msra.mxu0 %v108
  %361 = vmatpush.msra.mxu0 %v106
  %362 = vmatpush.msra.mxu0 %v104
  %363 = vmatpush.msra.mxu0 %v102
  %364 = vmatpush.msra.mxu0 %v100
  %365 = vmatpush.msra.mxu0 %v98
  %366 = vmatpush.msra.mxu0 %v96
  %367 = vmatpush.msra.mxu0 %v94
  %368 = vmatpush.msra.mxu0 %v92
  %369 = vmatpush.msra.mxu0 %v90
  %370 = vmatmul.f32.gmra.mxu0 %v19
  %v371 = vpop.f32.mrf.mxu0
  %v372 = vadd.f32 %v352, %v371
  %373 = vdwg.mxu0
  %374 = vmatpush.msra.mxu0 %v152
  %375 = vmatpush.msra.mxu0 %v150
  %376 = vmatpush.msra.mxu0 %v148
  %377 = vmatpush.msra.mxu0 %v146
  %378 = vmatpush.msra.mxu0 %v144
  %379 = vmatpush.msra.mxu0 %v142
  %380 = vmatpush.msra.mxu0 %v140
  %381 = vmatpush.msra.mxu0 %v138
  %382 = vmatpush.msra.mxu0 %v136
  %383 = vmatpush.msra.mxu0 %v134
  %384 = vmatpush.msra.mxu0 %v132
  %385 = vmatpush.msra.mxu0 %v130
  %386 = vmatpush.msra.mxu0 %v128
  %387 = vmatpush.msra.mxu0 %v126
  %388 = vmatpush.msra.mxu0 %v124
  %389 = vmatpush.msra.mxu0 %v122
  %390 = vmatmul.f32.gmra.mxu0 %v20
  %v391 = vpop.f32.mrf.mxu0
  %v392 = vadd.f32 %v372, %v391
  %393 = vdwg.mxu0
  %394 = vmatpush.msra.mxu0 %v184
  %395 = vmatpush.msra.mxu0 %v182
  %396 = vmatpush.msra.mxu0 %v180
  %397 = vmatpush.msra.mxu0 %v178
  %398 = vmatpush.msra.mxu0 %v176
  %399 = vmatpush.msra.mxu0 %v174
  %400 = vmatpush.msra.mxu0 %v172
  %401 = vmatpush.msra.mxu0 %v170
  %402 = vmatpush.msra.mxu0 %v168
  %403 = vmatpush.msra.mxu0 %v166
  %404 = vmatpush.msra.mxu0 %v164
  %405 = vmatpush.msra.mxu0 %v162
  %406 = vmatpush.msra.mxu0 %v160
  %407 = vmatpush.msra.mxu0 %v158
  %408 = vmatpush.msra.mxu0 %v156
  %409 = vmatpush.msra.mxu0 %v154
  %410 = vmatmul.f32.gmra.mxu0 %v21
  %v411 = vpop.f32.mrf.mxu0
  %v412 = vadd.f32 %v392, %v411
  %413 = vdwg.mxu0
  %414 = vmatpush.msra.mxu0 %v216
  %415 = vmatpush.msra.mxu0 %v214
  %416 = vmatpush.msra.mxu0 %v212
  %417 = vmatpush.msra.mxu0 %v210
  %418 = vmatpush.msra.mxu0 %v208
  %419 = vmatpush.msra.mxu0 %v206
  %420 = vmatpush.msra.mxu0 %v204
  %421 = vmatpush.msra.mxu0 %v202
  %422 = vmatpush.msra.mxu0 %v200
  %423 = vmatpush.msra.mxu0 %v198
  %424 = vmatpush.msra.mxu0 %v196
  %425 = vmatpush.msra.mxu0 %v194
  %426 = vmatpush.msra.mxu0 %v192
  %427 = vmatpush.msra.mxu0 %v190
  %428 = vmatpush.msra.mxu0 %v188
  %429 = vmatpush.msra.mxu0 %v186
  %430 = vmatmul.f32.gmra.mxu0 %v22
  %v431 = vpop.f32.mrf.mxu0
  %v432 = vadd.f32 %v412, %v431
  %433 = vdwg.mxu0
  %434 = vmatpush.msra.mxu0 %v248
  %435 = vmatpush.msra.mxu0 %v246
  %436 = vmatpush.msra.mxu0 %v244
  %437 = vmatpush.msra.mxu0 %v242
  %438 = vmatpush.msra.mxu0 %v240
  %439 = vmatpush.msra.mxu0 %v238
  %440 = vmatpush.msra.mxu0 %v236
  %441 = vmatpush.msra.mxu0 %v234
  %442 = vmatpush.msra.mxu0 %v232
  %443 = vmatpush.msra.mxu0 %v230
  %444 = vmatpush.msra.mxu0 %v228
  %445 = vmatpush.msra.mxu0 %v226
  %446 = vmatpush.msra.mxu0 %v224
  %447 = vmatpush.msra.mxu0 %v222
  %448 = vmatpush.msra.mxu0 %v220
  %449 = vmatpush.msra.mxu0 %v218
  %450 = vmatmul.f32.gmra.mxu0 %v23
  %v451 = vpop.f32.mrf.mxu0
  %v452 = vadd.f32 %v432, %v451
  %453 = vdwg.mxu0
  %454 = vmatpush.msra.mxu0 %v280
  %455 = vmatpush.msra.mxu0 %v278
  %456 = vmatpush.msra.mxu0 %v276
  %457 = vmatpush.msra.mxu0 %v274
  %458 = vmatpush.msra.mxu0 %v272
  %459 = vmatpush.msra.mxu0 %v270
  %460 = vmatpush.msra.mxu0 %v268
  %461 = vmatpush.msra.mxu0 %v266
  %462 = vmatpush.msra.mxu0 %v264
  %463 = vmatpush.msra.mxu0 %v262
  %464 = vmatpush.msra.mxu0 %v260
  %465 = vmatpush.msra.mxu0 %v258
  %466 = vmatpush.msra.mxu0 %v256
  %467 = vmatpush.msra.mxu0 %v254
  %468 = vmatpush.msra.mxu0 %v252
  %469 = vmatpush.msra.mxu0 %v250
  %470 = vmatmul.f32.gmra.mxu0 %v24
  %v471 = vpop.f32.mrf.mxu0
  %v472 = vadd.f32 %v452, %v471
  %473 = vdwg.mxu0
  %474 = vmatpush.msra.mxu0 %v312
  %475 = vmatpush.msra.mxu0 %v310
  %476 = vmatpush.msra.mxu0 %v308
  %477 = vmatpush.msra.mxu0 %v306
  %478 = vmatpush.msra.mxu0 %v304
  %479 = vmatpush.msra.mxu0 %v302
  %480 = vmatpush.msra.mxu0 %v300
  %481 = vmatpush.msra.mxu0 %v298
  %482 = vmatpush.msra.mxu0 %v296
  %483 = vmatpush.msra.mxu0 %v294
  %484 = vmatpush.msra.mxu0 %v292
  %485 = vmatpush.msra.mxu0 %v290
  %486 = vmatpush.msra.mxu0 %v288
  %487 = vmatpush.msra.mxu0 %v286
  %488 = vmatpush.msra.mxu0 %v284
  %489 = vmatpush.msra.mxu0 %v282
  %490 = vmatmul.f32.gmra.mxu0 %v25
  %v491 = vpop.f32.mrf.mxu0
  %v492 = vadd.f32 %v472, %v491
  %493 = vdwg.mxu0
  %494 = vmatpush.msra.mxu0 %v57
  %495 = vmatpush.msra.mxu0 %v55
  %496 = vmatpush.msra.mxu0 %v53
  %497 = vmatpush.msra.mxu0 %v51
  %498 = vmatpush.msra.mxu0 %v49
  %499 = vmatpush.msra.mxu0 %v47
  %500 = vmatpush.msra.mxu0 %v45
  %501 = vmatpush.msra.mxu0 %v43
  %502 = vmatpush.msra.mxu0 %v41
  %503 = vmatpush.msra.mxu0 %v39
  %504 = vmatpush.msra.mxu0 %v37
  %505 = vmatpush.msra.mxu0 %v35
  %506 = vmatpush.msra.mxu0 %v33
  %507 = vmatpush.msra.mxu0 %v31
  %508 = vmatpush.msra.mxu0 %v29
  %509 = vmatpush.msra.mxu0 %v27
  %510 = vmatmul.f32.gmra.mxu0 %v17
  %v511 = vpop.f32.mrf.mxu0
  %v512 = vadd.f32 0.0, %v511
  %513 = vdwg.mxu0
  %514 = vmatpush.msra.mxu0 %v89
  %515 = vmatpush.msra.mxu0 %v87
  %516 = vmatpush.msra.mxu0 %v85
  %517 = vmatpush.msra.mxu0 %v83
  %518 = vmatpush.msra.mxu0 %v81
  %519 = vmatpush.msra.mxu0 %v79
  %520 = vmatpush.msra.mxu0 %v77
  %521 = vmatpush.msra.mxu0 %v75
  %522 = vmatpush.msra.mxu0 %v73
  %523 = vmatpush.msra.mxu0 %v71
  %524 = vmatpush.msra.mxu0 %v69
  %525 = vmatpush.msra.mxu0 %v67
  %526 = vmatpush.msra.mxu0 %v65
  %527 = vmatpush.msra.mxu0 %v63
  %528 = vmatpush.msra.mxu0 %v61
  %529 = vmatpush.msra.mxu0 %v59
  %530 = vmatmul.f32.gmra.mxu0 %v18
  %v531 = vpop.f32.mrf.mxu0
  %v532 = vadd.f32 %v512, %v531
  %533 = vdwg.mxu0
  %534 = vmatpush.msra.mxu0 %v121
  %535 = vmatpush.msra.mxu0 %v119
  %536 = vmatpush.msra.mxu0 %v117
  %537 = vmatpush.msra.mxu0 %v115
  %538 = vmatpush.msra.mxu0 %v113
  %539 = vmatpush.msra.mxu0 %v111
  %540 = vmatpush.msra.mxu0 %v109
  %541 = vmatpush.msra.mxu0 %v107
  %542 = vmatpush.msra.mxu0 %v105
  %543 = vmatpush.msra.mxu0 %v103
  %544 = vmatpush.msra.mxu0 %v101
  %545 = vmatpush.msra.mxu0 %v99
  %546 = vmatpush.msra.mxu0 %v97
  %547 = vmatpush.msra.mxu0 %v95
  %548 = vmatpush.msra.mxu0 %v93
  %549 = vmatpush.msra.mxu0 %v91
  %550 = vmatmul.f32.gmra.mxu0 %v19
  %v551 = vpop.f32.mrf.mxu0
  %v552 = vadd.f32 %v532, %v551
  %553 = vdwg.mxu0
  %554 = vmatpush.msra.mxu0 %v153
  %555 = vmatpush.msra.mxu0 %v151
  %556 = vmatpush.msra.mxu0 %v149
  %557 = vmatpush.msra.mxu0 %v147
  %558 = vmatpush.msra.mxu0 %v145
  %559 = vmatpush.msra.mxu0 %v143
  %560 = vmatpush.msra.mxu0 %v141
  %561 = vmatpush.msra.mxu0 %v139
  %562 = vmatpush.msra.mxu0 %v137
  %563 = vmatpush.msra.mxu0 %v135
  %564 = vmatpush.msra.mxu0 %v133
  %565 = vmatpush.msra.mxu0 %v131
  %566 = vmatpush.msra.mxu0 %v129
  %567 = vmatpush.msra.mxu0 %v127
  %568 = vmatpush.msra.mxu0 %v125
  %569 = vmatpush.msra.mxu0 %v123
  %570 = vmatmul.f32.gmra.mxu0 %v20
  %v571 = vpop.f32.mrf.mxu0
  %v572 = vadd.f32 %v552, %v571
  %573 = vdwg.mxu0
  %574 = vmatpush.msra.mxu0 %v185
  %575 = vmatpush.msra.mxu0 %v183
  %576 = vmatpush.msra.mxu0 %v181
  %577 = vmatpush.msra.mxu0 %v179
  %578 = vmatpush.msra.mxu0 %v177
  %579 = vmatpush.msra.mxu0 %v175
  %580 = vmatpush.msra.mxu0 %v173
  %581 = vmatpush.msra.mxu0 %v171
  %582 = vmatpush.msra.mxu0 %v169
  %583 = vmatpush.msra.mxu0 %v167
  %584 = vmatpush.msra.mxu0 %v165
  %585 = vmatpush.msra.mxu0 %v163
  %586 = vmatpush.msra.mxu0 %v161
  %587 = vmatpush.msra.mxu0 %v159
  %588 = vmatpush.msra.mxu0 %v157
  %589 = vmatpush.msra.mxu0 %v155
  %590 = vmatmul.f32.gmra.mxu0 %v21
  %v591 = vpop.f32.mrf.mxu0
  %v592 = vadd.f32 %v572, %v591
  %593 = vdwg.mxu0
  %594 = vmatpush.msra.mxu0 %v217
  %595 = vmatpush.msra.mxu0 %v215
  %596 = vmatpush.msra.mxu0 %v213
  %597 = vmatpush.msra.mxu0 %v211
  %598 = vmatpush.msra.mxu0 %v209
  %599 = vmatpush.msra.mxu0 %v207
  %600 = vmatpush.msra.mxu0 %v205
  %601 = vmatpush.msra.mxu0 %v203
  %602 = vmatpush.msra.mxu0 %v201
  %603 = vmatpush.msra.mxu0 %v199
  %604 = vmatpush.msra.mxu0 %v197
  %605 = vmatpush.msra.mxu0 %v195
  %606 = vmatpush.msra.mxu0 %v193
  %607 = vmatpush.msra.mxu0 %v191
  %608 = vmatpush.msra.mxu0 %v189
  %609 = vmatpush.msra.mxu0 %v187
  %610 = vmatmul.f32.gmra.mxu0 %v22
  %v611 = vpop.f32.mrf.mxu0
  %v612 = vadd.f32 %v592, %v611
  %613 = vdwg.mxu0
  %614 = vmatpush.msra.mxu0 %v249
  %615 = vmatpush.msra.mxu0 %v247
  %616 = vmatpush.msra.mxu0 %v245
  %617 = vmatpush.msra.mxu0 %v243
  %618 = vmatpush.msra.mxu0 %v241
  %619 = vmatpush.msra.mxu0 %v239
  %620 = vmatpush.msra.mxu0 %v237
  %621 = vmatpush.msra.mxu0 %v235
  %622 = vmatpush.msra.mxu0 %v233
  %623 = vmatpush.msra.mxu0 %v231
  %624 = vmatpush.msra.mxu0 %v229
  %625 = vmatpush.msra.mxu0 %v227
  %626 = vmatpush.msra.mxu0 %v225
  %627 = vmatpush.msra.mxu0 %v223
  %628 = vmatpush.msra.mxu0 %v221
  %629 = vmatpush.msra.mxu0 %v219
  %630 = vmatmul.f32.gmra.mxu0 %v23
  %v631 = vpop.f32.mrf.mxu0
  %v632 = vadd.f32 %v612, %v631
  %633 = vdwg.mxu0
  %634 = vmatpush.msra.mxu0 %v281
  %635 = vmatpush.msra.mxu0 %v279
  %636 = vmatpush.msra.mxu0 %v277
  %637 = vmatpush.msra.mxu0 %v275
  %638 = vmatpush.msra.mxu0 %v273
  %639 = vmatpush.msra.mxu0 %v271
  %640 = vmatpush.msra.mxu0 %v269
  %641 = vmatpush.msra.mxu0 %v267
  %642 = vmatpush.msra.mxu0 %v265
  %643 = vmatpush.msra.mxu0 %v263
  %644 = vmatpush.msra.mxu0 %v261
  %645 = vmatpush.msra.mxu0 %v259
  %646 = vmatpush.msra.mxu0 %v257
  %647 = vmatpush.msra.mxu0 %v255
  %648 = vmatpush.msra.mxu0 %v253
  %649 = vmatpush.msra.mxu0 %v251
  %650 = vmatmul.f32.gmra.mxu0 %v24
  %v651 = vpop.f32.mrf.mxu0
  %v652 = vadd.f32 %v632, %v651
  %653 = vdwg.mxu0
  %654 = vmatpush.msra.mxu0 %v313
  %655 = vmatpush.msra.mxu0 %v311
  %656 = vmatpush.msra.mxu0 %v309
  %657 = vmatpush.msra.mxu0 %v307
  %658 = vmatpush.msra.mxu0 %v305
  %659 = vmatpush.msra.mxu0 %v303
  %660 = vmatpush.msra.mxu0 %v301
  %661 = vmatpush.msra.mxu0 %v299
  %662 = vmatpush.msra.mxu0 %v297
  %663 = vmatpush.msra.mxu0 %v295
  %664 = vmatpush.msra.mxu0 %v293
  %665 = vmatpush.msra.mxu0 %v291
  %666 = vmatpush.msra.mxu0 %v289
  %667 = vmatpush.msra.mxu0 %v287
  %668 = vmatpush.msra.mxu0 %v285
  %669 = vmatpush.msra.mxu0 %v283
  %670 = vmatmul.f32.gmra.mxu0 %v25
  %v671 = vpop.f32.mrf.mxu0
  %v672 = vadd.f32 %v652, %v671
  %673 = vdwg.mxu0
  %v674 = vld [vmem:[%s2] sm:$0x3]
  %v676 = vperm.slane %v674, 0
  %v677 = vperm.slane %v674, 1
  %v680 = vmul.f32 %v492, %v676
  %v681 = vmul.f32 %v672, %v677
  %v682 = vld [vmem:[%s3] sm:$0x3]
  %v684 = vperm.slane %v682, 0
  %v685 = vperm.slane %v682, 1
  %v688 = vadd.f32 %v680, %v684
  %v689 = vadd.f32 %v681, %v685
  %v690 = vmul.f32 %v688, 0.5
  %v691 = vmul.f32 %v689, 0.5
  %v692 = vmul.f32 %v688, 0.70710677
  %v693 = vmul.f32 %v689, 0.70710677
  %vm694 = vcmp.ge.f32.partialorder %v692, 0.0
  %vm695 = vcmp.ge.f32.partialorder %v693, 0.0
  %v696 = vsel %vm694, 1.0, -1.0
  %v697 = vsel %vm695, 1.0, -1.0
  %v698 = vand.u32 2147483647, %v692
  %v699 = vand.u32 2147483647, %v693
  %v700 = vmul.f32 %v698, 0.3275911
  %v701 = vmul.f32 %v699, 0.3275911
  %v702 = vadd.f32 %v700, 1.0
  %v703 = vadd.f32 %v701, 1.0
  %v704 = vrcp.pop %v702
  %v705 = vmul.f32 %v702, %v704
  %v706 = vsub.f32 1.0, %v705
  %v707 = vmul.f32 %v704, %v706
  %v708 = vadd.f32 %v704, %v707
  %vm709 = vweird.f32 %v702
  %vm710 = vweird.f32 %v704
  %vm711 = vmor %vm709, %vm710
  %v712 = vsel %vm711, %v704, %v708
  %v713 = vand.u32 2147483647, %v702
  %vm714 = vcmp.eq.f32.partialorder %v713, 8.507059e+37
  %v715 = vand.u32 %v702, 2147483648
  %v716 = vor.u32 1.1754944e-38, %v715
  %v717 = vsel %vm714, %v716, %v712
  %v718 = vmul.f32 1.0, %v717
  %v719 = vrcp.pop %v703
  %v720 = vmul.f32 %v703, %v719
  %v721 = vsub.f32 1.0, %v720
  %v722 = vmul.f32 %v719, %v721
  %v723 = vadd.f32 %v719, %v722
  %vm724 = vweird.f32 %v703
  %vm725 = vweird.f32 %v719
  %vm726 = vmor %vm724, %vm725
  %v727 = vsel %vm726, %v719, %v723
  %v728 = vand.u32 2147483647, %v703
  %vm729 = vcmp.eq.f32.partialorder %v728, 8.507059e+37
  %v730 = vand.u32 %v703, 2147483648
  %v731 = vor.u32 1.1754944e-38, %v730
  %v732 = vsel %vm729, %v731, %v727
  %v733 = vmul.f32 1.0, %v732
  %v734 = vmul.f32 %v718, 1.0614054
  %v735 = vmul.f32 %v733, 1.0614054
  %v736 = vadd.f32 %v734, -1.4531521
  %v737 = vadd.f32 %v735, -1.4531521
  %v738 = vmul.f32 %v736, %v718
  %v739 = vmul.f32 %v737, %v733
  %v740 = vadd.f32 %v738, 1.4214138
  %v741 = vadd.f32 %v739, 1.4214138
  %v742 = vmul.f32 %v740, %v718
  %v743 = vmul.f32 %v741, %v733
  %v744 = vadd.f32 %v742, -0.28449672
  %v745 = vadd.f32 %v743, -0.28449672
  %v746 = vmul.f32 %v744, %v718
  %v747 = vmul.f32 %v745, %v733
  %v748 = vadd.f32 %v746, 0.2548296
  %v749 = vadd.f32 %v747, 0.2548296
  %v750 = vmul.f32 %v748, %v718
  %v751 = vmul.f32 %v749, %v733
  %v752 = vsub.f32 0.0, %v698
  %v753 = vsub.f32 0.0, %v699
  %v754 = vmul.f32 %v752, %v698
  %v755 = vmul.f32 %v753, %v699
  %v756 = vmul.f32 %v754, 1.442695
  %v757 = vpow.pop %v756
  %v758 = vmul.f32 %v755, 1.442695
  %v759 = vpow.pop %v758
  %v760 = vmul.f32 %v750, %v757
  %v761 = vmul.f32 %v751, %v759
  %v762 = vsub.f32 1.0, %v760
  %v763 = vsub.f32 1.0, %v761
  %v764 = vmul.f32 %v696, %v762
  %v765 = vmul.f32 %v697, %v763
  %v766 = vadd.f32 %v764, 1.0
  %v767 = vadd.f32 %v765, 1.0
  %v768 = vmul.f32 %v690, %v766
  %v769 = vmul.f32 %v691, %v767
  %770 = vst [vmem:[%s4] sm:$0xff] %v768
  %771 = vst [vmem:[%s4 + $0x8] sm:$0xff] %v769
  // Predicated region
  $region18: #{branch_forward_pallas.5} parent=0 // pred_check
    _
  $region19: #{branch_forward_pallas.5} parent=0 // pred_check_branch
    %773 = sbr.rel (0) target = $region21
  $region20: #{branch_forward_pallas.5} parent=0 // pred_region
    _
  $region21: #{branch_forward_pallas.5} parent=0 // pred_fallthru
    _
  // Predicated region
  $region22: #{branch_forward_pallas.5} parent=0 // pred_check
    _
  $region23: #{branch_forward_pallas.5} parent=0 // pred_check_branch
    %775 = sbr.rel (0) target = $region25
  $region24: #{branch_forward_pallas.5} parent=0 // pred_region
    _
  $region25: #{branch_forward_pallas.5} parent=0 // pred_fallthru
    _

</llo_original>
